<compile_context>
chip_gen: v5e
topology: v5e:2x2
jax: 0.10.0
libtpu: 0.0.40
codegen_flags: <defaults>
</compile_context>

<pallas_src>
import functools

import jax
import jax.numpy as jnp
from jax.experimental import pallas as pl
from jax.experimental.pallas import tpu as pltpu

LANES = 128
CHUNK_R = 512      # strip-mine chunk: 512 x 128 f32 = 256 KiB per live temp
MAX_TILE_R = 4096  # 4096 x 128 f32 = 2 MiB per input block (8 MiB double-buffered pair)
# sigmoid(x) >= 0.2  <=>  x >= log(0.2 / 0.8) = log(0.25)   (sigmoid is monotonic)
LOGIT_02 = -1.3862943611198906


def _round_up(x, m):
    return -(-x // m) * m


def _accum_tile(out_ref, tgt_ref, acc_ref, tile_r, row_limit):
    """Accumulate (inter, union) partials of one (tile_r, 128) block into acc_ref.

    Strip-mined over CHUNK_R-row chunks so live intermediates stay small
    regardless of tile_r. `row_limit` is a *static* int (valid rows in this
    block) or None for the unmasked fast path.
    """
    n_chunks = tile_r // CHUNK_R

    def body(ci, carry):
        r0 = pl.multiple_of(ci * CHUNK_R, CHUNK_R)
        logits = out_ref[pl.ds(r0, CHUNK_R), :].astype(jnp.float32)
        o_bin = (logits >= jnp.float32(LOGIT_02)).astype(jnp.int32)
        t_int = tgt_ref[pl.ds(r0, CHUNK_R), :].astype(jnp.int32)
        inter = jnp.bitwise_and(o_bin, t_int)
        union = jnp.bitwise_or(o_bin, t_int)
        if row_limit is not None:
            rid = r0 + jax.lax.broadcasted_iota(jnp.int32, (CHUNK_R, LANES), 0)
            valid = rid < row_limit
            inter = jnp.where(valid, inter, 0)
            union = jnp.where(valid, union, 0)
        # VPU-only sublane-preserving partial reduce; the expensive cross-lane
        # reduce happens exactly once per core in the finalize step.
        acc_ref[0] = acc_ref[0] + inter.reshape(CHUNK_R // 8, 8, LANES).sum(axis=0)
        acc_ref[1] = acc_ref[1] + union.reshape(CHUNK_R // 8, 8, LANES).sum(axis=0)
        return carry

    jax.lax.fori_loop(0, n_chunks, body, 0, unroll=True)


def _iou_kernel(out_ref, tgt_ref, cnt_ref, acc_ref, *, tile_r, nb, edge_rows):
    c = pl.program_id(0)            # partial / core index ("parallel" axis)
    j = pl.program_id(1)            # block within this core's share
    nbj = pl.num_programs(1)
    g = c * nbj + j                 # global block index (may exceed nb-1 when nb is odd)

    @pl.when(j == 0)
    def _init():
        acc_ref[...] = jnp.zeros_like(acc_ref)

    if edge_rows == tile_r:
        # No ragged final block: every real block takes the unmasked fast path.
        @pl.when(g < nb)
        def _full():
            _accum_tile(out_ref, tgt_ref, acc_ref, tile_r, None)
    else:
        @pl.when(g < nb - 1)
        def _interior():
            _accum_tile(out_ref, tgt_ref, acc_ref, tile_r, None)

        # Only the final real block pays for the row mask; duplicated blocks
        # (g >= nb, present only to even out the 2-core grid) are skipped.
        @pl.when(g == nb - 1)
        def _edge():
            _accum_tile(out_ref, tgt_ref, acc_ref, tile_r, edge_rows)

    @pl.when(j == nbj - 1)
    def _finalize():
        # Exact int32 reduction; the single f32 cast happens in the wrapper.
        cnt_ref[0, 0] = jnp.sum(acc_ref[0])
        cnt_ref[0, 1] = jnp.sum(acc_ref[1])


def _tail_counts(logits, target):
    """(inter, union) int32 counts for a tiny (<128-element) tail slice."""
    o = (logits.astype(jnp.float32) >= jnp.float32(LOGIT_02)).astype(jnp.int32)
    t = target.astype(jnp.int32)
    return jnp.sum(o & t), jnp.sum(o | t)


@jax.jit
def loss_iou(output, target):
    """IoU loss matching Loss_iou.forward: 1 - sum(out & tgt) / sum(out | tgt)."""
    n = output.size
    out_flat = output.reshape(-1)
    tgt_flat = target.reshape(-1)

    rows = n // LANES
    n_main = rows * LANES

    # <=127-element ragged tail folded here (no full-array pad copy).
    if n_main < n:
        tail_i, tail_u = _tail_counts(out_flat[n_main:], tgt_flat[n_main:])
    else:
        tail_i = jnp.int32(0)
        tail_u = jnp.int32(0)

    if rows == 0:
        inter, union = tail_i, tail_u
    else:
        tile_r = min(MAX_TILE_R, _round_up(rows, CHUNK_R))
        assert tile_r % CHUNK_R == 0
        nb = -(-rows // tile_r)                  # number of real row-blocks
        n_cores = 2 if nb >= 2 else 1            # 2-way "parallel" split (both TCs on v7x)
        nbj = -(-nb // n_cores)                  # blocks per core
        edge_rows = rows - (nb - 1) * tile_r     # valid rows in the last real block

        out2d = out_flat[:n_main].reshape(rows, LANES)
        tgt2d = tgt_flat[:n_main].reshape(rows, LANES)
        if rows < tile_r:
            # Single-block case only (array <= ~2 MiB): cheap row pad to the block
            # height; pad rows are masked in-kernel so the pad value is irrelevant.
            pad = ((0, tile_r - rows), (0, 0))
            out2d = jnp.pad(out2d, pad)
            tgt2d = jnp.pad(tgt2d, pad)

        kernel = functools.partial(_iou_kernel, tile_r=tile_r, nb=nb, edge_rows=edge_rows)

        def in_idx(c, j):
            # Clamp the (at most one) grid-evening block to the last real block;
            # the kernel skips its contribution entirely.
            return (jnp.minimum(c * nbj + j, nb - 1), 0)

        counts = pl.pallas_call(
            kernel,
            out_shape=jax.ShapeDtypeStruct((n_cores, 2), jnp.int32),
            grid_spec=pltpu.PrefetchScalarGridSpec(
                num_scalar_prefetch=0,
                grid=(n_cores, nbj),
                in_specs=[
                    pl.BlockSpec((tile_r, LANES), in_idx),
                    pl.BlockSpec((tile_r, LANES), in_idx),
                ],
                out_specs=pl.BlockSpec((1, 2), lambda c, j: (c, 0),
                                       memory_space=pltpu.MemorySpace.SMEM),
                scratch_shapes=[pltpu.VMEM((2, 8, LANES), jnp.int32)],
            ),
            compiler_params=pltpu.CompilerParams(
                dimension_semantics=("parallel", "arbitrary"),
                vmem_limit_bytes=32 * 1024 * 1024,
            ),
        )(out2d, tgt2d)

        inter = jnp.sum(counts[:, 0]) + tail_i
        union = jnp.sum(counts[:, 1]) + tail_u

    # union == 0 (both tensors all-zero after thresholding) yields inf/nan,
    # matching the PyTorch reference.
    return jnp.float32(1.0) - inter.astype(jnp.float32) / union.astype(jnp.float32)


def _reference(output, target):
    o = jax.nn.sigmoid(output.astype(jnp.float32))
    o_bin = (o >= 0.2).astype(jnp.int32)
    t_int = target.astype(jnp.int32)
    union = jnp.sum(o_bin | t_int)
    inter = jnp.sum(o_bin & t_int)
    return 1.0 - inter.astype(jnp.float32) / union.astype(jnp.float32)


if __name__ == "__main__":
    key = jax.random.PRNGKey(0)
    ks = jax.random.split(key, 6)

    # Primary small segmentation-style case: (B, C, H, W) = (2, 4, 16, 16).
    output = jax.random.normal(ks[0], (2, 4, 16, 16), dtype=jnp.float32)
    target = jax.random.bernoulli(ks[1], p=0.5, shape=(2, 4, 16, 16)).astype(jnp.float32)
    loss = jax.block_until_ready(loss_iou(output, target))
    ref = jax.block_until_ready(_reference(output, target))
    assert jnp.allclose(loss, ref, atol=1e-6), (loss, ref)

    # Single-block path with a ragged row count (rows % 8 != 0, in-kernel mask).
    out_b = jax.random.normal(ks[2], (1, 1, 2148, 128), dtype=jnp.float32)
    tgt_b = jax.random.bernoulli(ks[3], p=0.3, shape=(1, 1, 2148, 128)).astype(jnp.float32)
    loss_b = jax.block_until_ready(loss_iou(out_b, tgt_b))
    ref_b = jax.block_until_ready(_reference(out_b, tgt_b))
    assert jnp.allclose(loss_b, ref_b, atol=2e-5), (loss_b, ref_b)

    # Multi-block + 2-way parallel split + misaligned element count (tail fold).
    out_c = jax.random.normal(ks[4], (1, 3, 700, 251), dtype=jnp.float32)
    tgt_c = jax.random.bernoulli(ks[5], p=0.4, shape=(1, 3, 700, 251)).astype(jnp.float32)
    loss_c = jax.block_until_ready(loss_iou(out_c, tgt_c))
    ref_c = jax.block_until_ready(_reference(out_c, tgt_c))
    assert jnp.allclose(loss_c, ref_c, atol=2e-5), (loss_c, ref_c)

    print("KERNEL_OK")
</pallas_src>

<mosaic_0001>
module attributes {stable_mosaic.version = 11 : i64} {
  func.func @_iou_kernel(%arg0: i32, %arg1: i32, %arg2: memref<512x128xf32, #tpu.memory_space<vmem>>, %arg3: memref<512x128xf32, #tpu.memory_space<vmem>>, %arg4: memref<1x2xi32, #tpu.memory_space<smem>>, %arg5: memref<2x8x128xi32, #tpu.memory_space<vmem>>) attributes {dimension_semantics = [#tpu.dimension_semantics<parallel>, #tpu.dimension_semantics<arbitrary>], iteration_bounds = array<i64: 1, 1>, scalar_prefetch = 0 : i64, scratch_operands = 1 : i64, tpu.core_type = #tpu.core_type<tc>, window_params = [{transform_indices = @transform_0, window_bounds = array<i64: 512, 128>}, {transform_indices = @transform_1, window_bounds = array<i64: 512, 128>}, {transform_indices = @transform_2, window_bounds = array<i64: 1, 2>}]} {
    %c1_i32 = arith.constant 1 : i32
    %0 = arith.muli %arg0, %c1_i32 : i32
    %1 = arith.addi %0, %arg1 : i32
    %c0_i32 = arith.constant 0 : i32
    %2 = arith.cmpi eq, %arg1, %c0_i32 : i32
    %3 = arith.extui %2 : i1 to i32
    %c0_i32_0 = arith.constant 0 : i32
    %4 = arith.cmpi ne, %3, %c0_i32_0 : i32
    scf.if %4 {
      %c0_i32_7 = arith.constant 0 : i32
      %14 = vector.broadcast %c0_i32_7 : i32 to vector<2x8x128xi32>
      %c0 = arith.constant 0 : index
      %c0_8 = arith.constant 0 : index
      %c0_9 = arith.constant 0 : index
      %15 = vector.load %arg5[%c0, %c0_8, %c0_9] : memref<2x8x128xi32, #tpu.memory_space<vmem>>, vector<2x8x128xi32>
      tpu.vector_store %arg5[%c0, %c0_8, %c0_9], %14 {strides = array<i32>} : memref<2x8x128xi32, #tpu.memory_space<vmem>>, vector<2x8x128xi32>,
    } else {
    }
    %c0_i32_1 = arith.constant 0 : i32
    %5 = arith.cmpi slt, %1, %c0_i32_1 : i32
    %6 = arith.extui %5 : i1 to i32
    %c0_i32_2 = arith.constant 0 : i32
    %7 = arith.cmpi ne, %6, %c0_i32_2 : i32
    scf.if %7 {
      %c0_i32_7 = arith.constant 0 : i32
      %c512_i32 = arith.constant 512 : i32
      %14 = arith.muli %c0_i32_7, %c512_i32 : i32
      %15 = tpu.assume_multiple %14, 512 : i32
      %16 = arith.index_cast %15 : i32 to index
      %c0 = arith.constant 0 : index
      %17 = vector.load %arg2[%16, %c0] : memref<512x128xf32, #tpu.memory_space<vmem>>, vector<512x128xf32>
      %cst = arith.constant -1.38629436 : f32
      %18 = vector.broadcast %cst : f32 to vector<512x128xf32>
      %19 = arith.cmpf oge, %17, %18 : vector<512x128xf32>
      %20 = arith.extui %19 : vector<512x128xi1> to vector<512x128xi32>
      %21 = arith.index_cast %15 : i32 to index
      %c0_8 = arith.constant 0 : index
      %22 = vector.load %arg3[%21, %c0_8] : memref<512x128xf32, #tpu.memory_space<vmem>>, vector<512x128xf32>
      %23 = arith.fptosi %22 : vector<512x128xf32> to vector<512x128xi32>
      %24 = arith.andi %20, %23 : vector<512x128xi32>
      %25 = arith.ori %20, %23 : vector<512x128xi32>
      %c0_9 = arith.constant 0 : index
      %c0_10 = arith.constant 0 : index
      %c0_11 = arith.constant 0 : index
      %26 = vector.load %arg5[%c0_9, %c0_10, %c0_11] : memref<2x8x128xi32, #tpu.memory_space<vmem>>, vector<1x8x128xi32>
      %27 = vector.shape_cast %26 : vector<1x8x128xi32> to vector<8x128xi32>
      %28 = vector.shape_cast %24 : vector<512x128xi32> to vector<64x8x128xi32>
      %cst_12 = arith.constant dense<0> : vector<8x128xi32>
      %29 = vector.multi_reduction <add>, %28, %cst_12 [0] : vector<64x8x128xi32> to vector<8x128xi32>
      %30 = arith.addi %27, %29 : vector<8x128xi32>
      %c0_13 = arith.constant 0 : index
      %c0_14 = arith.constant 0 : index
      %c0_15 = arith.constant 0 : index
      %31 = vector.load %arg5[%c0_13, %c0_14, %c0_15] : memref<2x8x128xi32, #tpu.memory_space<vmem>>, vector<1x8x128xi32>
      %32 = vector.shape_cast %31 : vector<1x8x128xi32> to vector<8x128xi32>
      %33 = vector.shape_cast %30 : vector<8x128xi32> to vector<1x8x128xi32>
      tpu.vector_store %arg5[%c0_13, %c0_14, %c0_15], %33 {strides = array<i32>} : memref<2x8x128xi32, #tpu.memory_space<vmem>>, vector<1x8x128xi32>,
      %c1 = arith.constant 1 : index
      %c0_16 = arith.constant 0 : index
      %c0_17 = arith.constant 0 : index
      %34 = vector.load %arg5[%c1, %c0_16, %c0_17] : memref<2x8x128xi32, #tpu.memory_space<vmem>>, vector<1x8x128xi32>
      %35 = vector.shape_cast %34 : vector<1x8x128xi32> to vector<8x128xi32>
      %36 = vector.shape_cast %25 : vector<512x128xi32> to vector<64x8x128xi32>
      %cst_18 = arith.constant dense<0> : vector<8x128xi32>
      %37 = vector.multi_reduction <add>, %36, %cst_18 [0] : vector<64x8x128xi32> to vector<8x128xi32>
      %38 = arith.addi %35, %37 : vector<8x128xi32>
      %c1_19 = arith.constant 1 : index
      %c0_20 = arith.constant 0 : index
      %c0_21 = arith.constant 0 : index
      %39 = vector.load %arg5[%c1_19, %c0_20, %c0_21] : memref<2x8x128xi32, #tpu.memory_space<vmem>>, vector<1x8x128xi32>
      %40 = vector.shape_cast %39 : vector<1x8x128xi32> to vector<8x128xi32>
      %41 = vector.shape_cast %38 : vector<8x128xi32> to vector<1x8x128xi32>
      tpu.vector_store %arg5[%c1_19, %c0_20, %c0_21], %41 {strides = array<i32>} : memref<2x8x128xi32, #tpu.memory_space<vmem>>, vector<1x8x128xi32>,
      %c1_i32_22 = arith.constant 1 : i32
    } else {
    }
    %c0_i32_3 = arith.constant 0 : i32
    %8 = arith.cmpi eq, %1, %c0_i32_3 : i32
    %9 = arith.extui %8 : i1 to i32
    %c0_i32_4 = arith.constant 0 : i32
    %10 = arith.cmpi ne, %9, %c0_i32_4 : i32
    scf.if %10 {
      %c0_i32_7 = arith.constant 0 : i32
      %c512_i32 = arith.constant 512 : i32
      %14 = arith.muli %c0_i32_7, %c512_i32 : i32
      %15 = tpu.assume_multiple %14, 512 : i32
      %16 = arith.index_cast %15 : i32 to index
      %c0 = arith.constant 0 : index
      %17 = vector.load %arg2[%16, %c0] : memref<512x128xf32, #tpu.memory_space<vmem>>, vector<512x128xf32>
      %cst = arith.constant -1.38629436 : f32
      %18 = vector.broadcast %cst : f32 to vector<512x128xf32>
      %19 = arith.cmpf oge, %17, %18 : vector<512x128xf32>
      %20 = arith.extui %19 : vector<512x128xi1> to vector<512x128xi32>
      %21 = arith.index_cast %15 : i32 to index
      %c0_8 = arith.constant 0 : index
      %22 = vector.load %arg3[%21, %c0_8] : memref<512x128xf32, #tpu.memory_space<vmem>>, vector<512x128xf32>
      %23 = arith.fptosi %22 : vector<512x128xf32> to vector<512x128xi32>
      %24 = arith.andi %20, %23 : vector<512x128xi32>
      %25 = arith.ori %20, %23 : vector<512x128xi32>
      %26 = tpu.iota {dimensions = array<i32: 0>} : vector<512x128xi32>
      %27 = vector.broadcast %15 : i32 to vector<512x128xi32>
      %28 = arith.addi %27, %26 : vector<512x128xi32>
      %c16_i32 = arith.constant 16 : i32
      %29 = vector.broadcast %c16_i32 : i32 to vector<512x128xi32>
      %30 = arith.cmpi slt, %28, %29 : vector<512x128xi32>
      %c0_i32_9 = arith.constant 0 : i32
      %31 = vector.broadcast %c0_i32_9 : i32 to vector<512x128xi32>
      %32 = arith.select %30, %24, %31 : vector<512x128xi1>, vector<512x128xi32>
      %c0_i32_10 = arith.constant 0 : i32
      %33 = vector.broadcast %c0_i32_10 : i32 to vector<512x128xi32>
      %34 = arith.select %30, %25, %33 : vector<512x128xi1>, vector<512x128xi32>
      %c0_11 = arith.constant 0 : index
      %c0_12 = arith.constant 0 : index
      %c0_13 = arith.constant 0 : index
      %35 = vector.load %arg5[%c0_11, %c0_12, %c0_13] : memref<2x8x128xi32, #tpu.memory_space<vmem>>, vector<1x8x128xi32>
      %36 = vector.shape_cast %35 : vector<1x8x128xi32> to vector<8x128xi32>
      %37 = vector.shape_cast %32 : vector<512x128xi32> to vector<64x8x128xi32>
      %cst_14 = arith.constant dense<0> : vector<8x128xi32>
      %38 = vector.multi_reduction <add>, %37, %cst_14 [0] : vector<64x8x128xi32> to vector<8x128xi32>
      %39 = arith.addi %36, %38 : vector<8x128xi32>
      %c0_15 = arith.constant 0 : index
      %c0_16 = arith.constant 0 : index
      %c0_17 = arith.constant 0 : index
      %40 = vector.load %arg5[%c0_15, %c0_16, %c0_17] : memref<2x8x128xi32, #tpu.memory_space<vmem>>, vector<1x8x128xi32>
      %41 = vector.shape_cast %40 : vector<1x8x128xi32> to vector<8x128xi32>
      %42 = vector.shape_cast %39 : vector<8x128xi32> to vector<1x8x128xi32>
      tpu.vector_store %arg5[%c0_15, %c0_16, %c0_17], %42 {strides = array<i32>} : memref<2x8x128xi32, #tpu.memory_space<vmem>>, vector<1x8x128xi32>,
      %c1 = arith.constant 1 : index
      %c0_18 = arith.constant 0 : index
      %c0_19 = arith.constant 0 : index
      %43 = vector.load %arg5[%c1, %c0_18, %c0_19] : memref<2x8x128xi32, #tpu.memory_space<vmem>>, vector<1x8x128xi32>
      %44 = vector.shape_cast %43 : vector<1x8x128xi32> to vector<8x128xi32>
      %45 = vector.shape_cast %34 : vector<512x128xi32> to vector<64x8x128xi32>
      %cst_20 = arith.constant dense<0> : vector<8x128xi32>
      %46 = vector.multi_reduction <add>, %45, %cst_20 [0] : vector<64x8x128xi32> to vector<8x128xi32>
      %47 = arith.addi %44, %46 : vector<8x128xi32>
      %c1_21 = arith.constant 1 : index
      %c0_22 = arith.constant 0 : index
      %c0_23 = arith.constant 0 : index
      %48 = vector.load %arg5[%c1_21, %c0_22, %c0_23] : memref<2x8x128xi32, #tpu.memory_space<vmem>>, vector<1x8x128xi32>
      %49 = vector.shape_cast %48 : vector<1x8x128xi32> to vector<8x128xi32>
      %50 = vector.shape_cast %47 : vector<8x128xi32> to vector<1x8x128xi32>
      tpu.vector_store %arg5[%c1_21, %c0_22, %c0_23], %50 {strides = array<i32>} : memref<2x8x128xi32, #tpu.memory_space<vmem>>, vector<1x8x128xi32>,
      %c1_i32_24 = arith.constant 1 : i32
    } else {
    }
    %c0_i32_5 = arith.constant 0 : i32
    %11 = arith.cmpi eq, %arg1, %c0_i32_5 : i32
    %12 = arith.extui %11 : i1 to i32
    %c0_i32_6 = arith.constant 0 : i32
    %13 = arith.cmpi ne, %12, %c0_i32_6 : i32
    scf.if %13 {
      %c0 = arith.constant 0 : index
      %c0_7 = arith.constant 0 : index
      %c0_8 = arith.constant 0 : index
      %14 = vector.load %arg5[%c0, %c0_7, %c0_8] : memref<2x8x128xi32, #tpu.memory_space<vmem>>, vector<1x8x128xi32>
      %15 = vector.shape_cast %14 : vector<1x8x128xi32> to vector<8x128xi32>
      %16 = vector.shape_cast %15 : vector<8x128xi32> to vector<1x8x128xi32>
      %cst = arith.constant dense<0> : vector<1xi32>
      %17 = vector.multi_reduction <add>, %16, %cst [1, 2] : vector<1x8x128xi32> to vector<1xi32>
      %18 = vector.shape_cast %17 : vector<1xi32> to vector<1x1x1xi32>
      %19 = vector.extract %18[0, 0, 0] : i32 from vector<1x1x1xi32>
      %c0_9 = arith.constant 0 : index
      %c0_10 = arith.constant 0 : index
      %20 = memref.load %arg4[%c0_9, %c0_10] : memref<1x2xi32, #tpu.memory_space<smem>>
      memref.store %19, %arg4[%c0_9, %c0_10] : memref<1x2xi32, #tpu.memory_space<smem>>
      %c1 = arith.constant 1 : index
      %c0_11 = arith.constant 0 : index
      %c0_12 = arith.constant 0 : index
      %21 = vector.load %arg5[%c1, %c0_11, %c0_12] : memref<2x8x128xi32, #tpu.memory_space<vmem>>, vector<1x8x128xi32>
      %22 = vector.shape_cast %21 : vector<1x8x128xi32> to vector<8x128xi32>
      %23 = vector.shape_cast %22 : vector<8x128xi32> to vector<1x8x128xi32>
      %cst_13 = arith.constant dense<0> : vector<1xi32>
      %24 = vector.multi_reduction <add>, %23, %cst_13 [1, 2] : vector<1x8x128xi32> to vector<1xi32>
      %25 = vector.shape_cast %24 : vector<1xi32> to vector<1x1x1xi32>
      %26 = vector.extract %25[0, 0, 0] : i32 from vector<1x1x1xi32>
      %c0_14 = arith.constant 0 : index
      %c1_15 = arith.constant 1 : index
      %27 = memref.load %arg4[%c0_14, %c1_15] : memref<1x2xi32, #tpu.memory_space<smem>>
      memref.store %26, %arg4[%c0_14, %c1_15] : memref<1x2xi32, #tpu.memory_space<smem>>
    } else {
    }
    return
  }
  func.func @transform_0(%arg0: i32, %arg1: i32) -> (i32, i32) {
    %c1_i32 = arith.constant 1 : i32
    %0 = arith.muli %arg0, %c1_i32 : i32
    %1 = arith.addi %0, %arg1 : i32
    %c0_i32 = arith.constant 0 : i32
    %2 = arith.minsi %1, %c0_i32 : i32
    %c0_i32_0 = arith.constant 0 : i32
    %c0_i32_1 = arith.constant 0 : i32
    return %2, %c0_i32_0 : i32, i32
  }
  func.func @transform_1(%arg0: i32, %arg1: i32) -> (i32, i32) {
    %c1_i32 = arith.constant 1 : i32
    %0 = arith.muli %arg0, %c1_i32 : i32
    %1 = arith.addi %0, %arg1 : i32
    %c0_i32 = arith.constant 0 : i32
    %2 = arith.minsi %1, %c0_i32 : i32
    %c0_i32_0 = arith.constant 0 : i32
    %c0_i32_1 = arith.constant 0 : i32
    return %2, %c0_i32_0 : i32, i32
  }
  func.func @transform_2(%arg0: i32, %arg1: i32) -> (i32, i32) {
    %c0_i32 = arith.constant 0 : i32
    %c0_i32_0 = arith.constant 0 : i32
    return %arg0, %c0_i32 : i32, i32
  }
}

</mosaic_0001>

<llo_original>
// kernel: loss_iou.1
$region0: #{loss_iou.1}
  #allocation0 [shape = 'u32[]', space=smem, size = 0x4, offset = 0x4, fixed_abs, tag = 'smem constant byte address 0x4 - core index']
  #allocation1 [shape = 'u32[72,128]{1,0:T(1,128)}', space=vmem, size = 0x9000, scoped, tag = 'internal scratch']
  #allocation2 [shape = 's32[2,8,128]{2,1,0:T(8,128)}', space=vmem, size = 0x2000, scoped, tag = 'scratch operand']
  %s0 = inlined_call_operand.vmem [shape: f32[512,128], index: 0, kind: input, shape index: {}]
  %s1 = inlined_call_operand.vmem [shape: f32[512,128], index: 1, kind: input, shape index: {}]
  %s2 = inlined_call_operand.vmem [shape: s32[1,2], index: 2, kind: output, shape index: {}]
  %s3 = sld [smem:[#allocation0]]
  $region34: #{loss_iou.1} parent=0
    _
  %s5 = ssub.s32 1, %s3
  %s6 = scalar_select 0, %s5, %s3
  $region1: #{loss_iou.1} parent=0
    #allocation3 [shape = 'u8[512]{0}', space=smem, size = 0x200, scoped, tag = 'output window, operand 0, single buffered']
    #allocation4 [shape = 's32[1]{0}', space=sflag, size = 0x4, scoped, tag = 'scoped memory for loss_iou.1']
    %7 = vsyncpa [#allocation4], 0
    // Predicated region
    $region2: #{loss_iou.1} parent=1 // pred_check
      _
    $region3: #{loss_iou.1} parent=1 // pred_check_branch
      %9 = sbr.rel (0) target = $region5
    $region4: #{loss_iou.1} parent=1 // pred_region
      %s10 = sadd.s32 0, 0
      %p11 = scmp.lt.s32.totalorder %s10, 0
      %s12 = scalar_select %p11, %s10, 0
      %s13 = smul.u32 64, %s12
      %p14 = scmp.lt.s32.totalorder %s13, 63
      %s15 = scalar_select %p14, %s13, 63
      %s16 = smul.addr %s15, 8
      %s17 = scalar_lea.vmem %s0, %s16
      %s18 = sadd.s32 0, 0
      %p19 = scmp.lt.s32.totalorder %s18, 0
      %s20 = scalar_select %p19, %s18, 0
      %s21 = smul.u32 64, %s20
    $region5: #{loss_iou.1} parent=1 // pred_fallthru
      _
    // Predicated region
    $region6: #{loss_iou.1} parent=1 // pred_check
      _
    $region7: #{loss_iou.1} parent=1 // pred_check_branch
      %23 = sbr.rel (0) target = $region9
    $region8: #{loss_iou.1} parent=1 // pred_region
      %s24 = sadd.s32 0, 0
      %p25 = scmp.lt.s32.totalorder %s24, 0
      %s26 = scalar_select %p25, %s24, 0
      %s27 = smul.u32 64, %s26
      %p28 = scmp.lt.s32.totalorder %s27, 63
      %s29 = scalar_select %p28, %s27, 63
      %s30 = smul.addr %s29, 8
      %s31 = scalar_lea.vmem %s1, %s30
      %s32 = sadd.s32 0, 0
      %p33 = scmp.lt.s32.totalorder %s32, 0
      %s34 = scalar_select %p33, %s32, 0
      %s35 = smul.u32 64, %s34
    $region9: #{loss_iou.1} parent=1 // pred_fallthru
      _
    %s36 = sadd.s32 0, 0
    %p37 = scmp.lt.s32.totalorder %s36, 0
    %s38 = scalar_select %p37, %s36, 0
    %s39 = smul.u32 64, %s38
    %p40 = scmp.lt.s32.totalorder %s39, 63
    %s41 = scalar_select %p40, %s39, 63
    %s42 = smul.addr %s41, 8
    %s43 = scalar_lea.vmem %s0, %s42
    %s44 = sadd.s32 0, 0
    %p45 = scmp.lt.s32.totalorder %s44, 0
    %s46 = scalar_select %p45, %s44, 0
    %s47 = smul.u32 64, %s46
    %p48 = scmp.lt.s32.totalorder %s47, 63
    %s49 = scalar_select %p48, %s47, 63
    %s50 = smul.addr %s49, 8
    %s51 = scalar_lea.vmem %s1, %s50
    %s52 = sadd.s32 0, 0
    %p53 = scmp.lt.s32.totalorder %s52, 0
    %s54 = scalar_select %p53, %s52, 0
    %s55 = smul.u32 64, %s54
    %p56 = scmp.lt.s32.totalorder %s55, 63
    %s57 = scalar_select %p56, %s55, 63
    %s58 = smul.addr %s57, 8
    %s59 = scalar_lea.vmem %s0, %s58
    %s60 = sadd.s32 0, 0
    %p61 = scmp.lt.s32.totalorder %s60, 0
    %s62 = scalar_select %p61, %s60, 0
    %s63 = smul.u32 64, %s62
    %s64 = sadd.s32 0, 0
    %p65 = scmp.lt.s32.totalorder %s64, 0
    %s66 = scalar_select %p65, %s64, 0
    %s67 = smul.u32 64, %s66
    %p68 = scmp.lt.s32.totalorder %s67, 63
    %s69 = scalar_select %p68, %s67, 63
    %s70 = smul.addr %s69, 8
    %s71 = scalar_lea.vmem %s1, %s70
    %s72 = sadd.s32 0, 0
    %p73 = scmp.lt.s32.totalorder %s72, 0
    %s74 = scalar_select %p73, %s72, 0
    %s75 = smul.u32 64, %s74
    %s76 = sadd.s32 0, 0
    %p77 = scmp.eq.s32.totalorder 0, 0
    // Predicated region
    $region10: #{loss_iou.1} parent=1 // pred_check
      %p78 = pneg %p77
    $region11: #{loss_iou.1} parent=1 // pred_check_branch
      %80 = sbr.rel (%p78) target = $region13
    $region12: #{loss_iou.1} parent=1 // pred_region
      %81 = vst [vmem:[#allocation2] sm:$0xff] 0
      %82 = vst [vmem:[#allocation2 + $0x8] sm:$0xff] 0
    $region13: #{loss_iou.1} parent=1 // pred_fallthru
      _
    %p83 = scmp.lt.s32.totalorder %s76, 0
    // Predicated region
    $region14: #{loss_iou.1} parent=1 // pred_check
      %p84 = pneg %p83
    $region15: #{loss_iou.1} parent=1 // pred_check_branch
      %86 = sbr.rel (%p84) target = $region17
    $region16: #{loss_iou.1} parent=1 // pred_region
      %v87 = vld [vmem:[%s59] sm:$0xff]
      %v88 = vld [vmem:[%s59 + $0x8] sm:$0xff]
      %v89 = vld [vmem:[%s59 + $0x10] sm:$0xff]
      %v90 = vld [vmem:[%s59 + $0x18] sm:$0xff]
      %v91 = vld [vmem:[%s59 + $0x20] sm:$0xff]
      %v92 = vld [vmem:[%s59 + $0x28] sm:$0xff]
      %v93 = vld [vmem:[%s59 + $0x30] sm:$0xff]
      %v94 = vld [vmem:[%s59 + $0x38] sm:$0xff]
      %v95 = vld [vmem:[%s59 + $0x40] sm:$0xff]
      %v96 = vld [vmem:[%s59 + $0x48] sm:$0xff]
      %v97 = vld [vmem:[%s59 + $0x50] sm:$0xff]
      %v98 = vld [vmem:[%s59 + $0x58] sm:$0xff]
      %v99 = vld [vmem:[%s59 + $0x60] sm:$0xff]
      %v100 = vld [vmem:[%s59 + $0x68] sm:$0xff]
      %v101 = vld [vmem:[%s59 + $0x70] sm:$0xff]
      %v102 = vld [vmem:[%s59 + $0x78] sm:$0xff]
      %v103 = vld [vmem:[%s59 + $0x80] sm:$0xff]
      %v104 = vld [vmem:[%s59 + $0x88] sm:$0xff]
      %v105 = vld [vmem:[%s59 + $0x90] sm:$0xff]
      %v106 = vld [vmem:[%s59 + $0x98] sm:$0xff]
      %v107 = vld [vmem:[%s59 + $0xa0] sm:$0xff]
      %v108 = vld [vmem:[%s59 + $0xa8] sm:$0xff]
      %v109 = vld [vmem:[%s59 + $0xb0] sm:$0xff]
      %v110 = vld [vmem:[%s59 + $0xb8] sm:$0xff]
      %v111 = vld [vmem:[%s59 + $0xc0] sm:$0xff]
      %v112 = vld [vmem:[%s59 + $0xc8] sm:$0xff]
      %v113 = vld [vmem:[%s59 + $0xd0] sm:$0xff]
      %v114 = vld [vmem:[%s59 + $0xd8] sm:$0xff]
      %v115 = vld [vmem:[%s59 + $0xe0] sm:$0xff]
      %v116 = vld [vmem:[%s59 + $0xe8] sm:$0xff]
      %v117 = vld [vmem:[%s59 + $0xf0] sm:$0xff]
      %v118 = vld [vmem:[%s59 + $0xf8] sm:$0xff]
      %v119 = vld [vmem:[%s59 + $0x100] sm:$0xff]
      %v120 = vld [vmem:[%s59 + $0x108] sm:$0xff]
      %v121 = vld [vmem:[%s59 + $0x110] sm:$0xff]
      %v122 = vld [vmem:[%s59 + $0x118] sm:$0xff]
      %v123 = vld [vmem:[%s59 + $0x120] sm:$0xff]
      %v124 = vld [vmem:[%s59 + $0x128] sm:$0xff]
      %v125 = vld [vmem:[%s59 + $0x130] sm:$0xff]
      %v126 = vld [vmem:[%s59 + $0x138] sm:$0xff]
      %v127 = vld [vmem:[%s59 + $0x140] sm:$0xff]
      %v128 = vld [vmem:[%s59 + $0x148] sm:$0xff]
      %v129 = vld [vmem:[%s59 + $0x150] sm:$0xff]
      %v130 = vld [vmem:[%s59 + $0x158] sm:$0xff]
      %v131 = vld [vmem:[%s59 + $0x160] sm:$0xff]
      %v132 = vld [vmem:[%s59 + $0x168] sm:$0xff]
      %v133 = vld [vmem:[%s59 + $0x170] sm:$0xff]
      %v134 = vld [vmem:[%s59 + $0x178] sm:$0xff]
      %v135 = vld [vmem:[%s59 + $0x180] sm:$0xff]
      %v136 = vld [vmem:[%s59 + $0x188] sm:$0xff]
      %v137 = vld [vmem:[%s59 + $0x190] sm:$0xff]
      %v138 = vld [vmem:[%s59 + $0x198] sm:$0xff]
      %v139 = vld [vmem:[%s59 + $0x1a0] sm:$0xff]
      %v140 = vld [vmem:[%s59 + $0x1a8] sm:$0xff]
      %v141 = vld [vmem:[%s59 + $0x1b0] sm:$0xff]
      %v142 = vld [vmem:[%s59 + $0x1b8] sm:$0xff]
      %v143 = vld [vmem:[%s59 + $0x1c0] sm:$0xff]
      %v144 = vld [vmem:[%s59 + $0x1c8] sm:$0xff]
      %v145 = vld [vmem:[%s59 + $0x1d0] sm:$0xff]
      %v146 = vld [vmem:[%s59 + $0x1d8] sm:$0xff]
      %v147 = vld [vmem:[%s59 + $0x1e0] sm:$0xff]
      %v148 = vld [vmem:[%s59 + $0x1e8] sm:$0xff]
      %v149 = vld [vmem:[%s59 + $0x1f0] sm:$0xff]
      %v150 = vld [vmem:[%s59 + $0x1f8] sm:$0xff]
      %vm151 = vcmp.ge.f32.partialorder %v87, -1.3862944
      %vm152 = vcmp.ge.f32.partialorder %v88, -1.3862944
      %vm153 = vcmp.ge.f32.partialorder %v89, -1.3862944
      %vm154 = vcmp.ge.f32.partialorder %v90, -1.3862944
      %vm155 = vcmp.ge.f32.partialorder %v91, -1.3862944
      %vm156 = vcmp.ge.f32.partialorder %v92, -1.3862944
      %vm157 = vcmp.ge.f32.partialorder %v93, -1.3862944
      %vm158 = vcmp.ge.f32.partialorder %v94, -1.3862944
      %vm159 = vcmp.ge.f32.partialorder %v95, -1.3862944
      %vm160 = vcmp.ge.f32.partialorder %v96, -1.3862944
      %vm161 = vcmp.ge.f32.partialorder %v97, -1.3862944
      %vm162 = vcmp.ge.f32.partialorder %v98, -1.3862944
      %vm163 = vcmp.ge.f32.partialorder %v99, -1.3862944
      %vm164 = vcmp.ge.f32.partialorder %v100, -1.3862944
      %vm165 = vcmp.ge.f32.partialorder %v101, -1.3862944
      %vm166 = vcmp.ge.f32.partialorder %v102, -1.3862944
      %vm167 = vcmp.ge.f32.partialorder %v103, -1.3862944
      %vm168 = vcmp.ge.f32.partialorder %v104, -1.3862944
      %vm169 = vcmp.ge.f32.partialorder %v105, -1.3862944
      %vm170 = vcmp.ge.f32.partialorder %v106, -1.3862944
      %vm171 = vcmp.ge.f32.partialorder %v107, -1.3862944
      %vm172 = vcmp.ge.f32.partialorder %v108, -1.3862944
      %vm173 = vcmp.ge.f32.partialorder %v109, -1.3862944
      %vm174 = vcmp.ge.f32.partialorder %v110, -1.3862944
      %vm175 = vcmp.ge.f32.partialorder %v111, -1.3862944
      %vm176 = vcmp.ge.f32.partialorder %v112, -1.3862944
      %vm177 = vcmp.ge.f32.partialorder %v113, -1.3862944
      %vm178 = vcmp.ge.f32.partialorder %v114, -1.3862944
      %vm179 = vcmp.ge.f32.partialorder %v115, -1.3862944
      %vm180 = vcmp.ge.f32.partialorder %v116, -1.3862944
      %vm181 = vcmp.ge.f32.partialorder %v117, -1.3862944
      %vm182 = vcmp.ge.f32.partialorder %v118, -1.3862944
      %vm183 = vcmp.ge.f32.partialorder %v119, -1.3862944
      %vm184 = vcmp.ge.f32.partialorder %v120, -1.3862944
      %vm185 = vcmp.ge.f32.partialorder %v121, -1.3862944
      %vm186 = vcmp.ge.f32.partialorder %v122, -1.3862944
      %vm187 = vcmp.ge.f32.partialorder %v123, -1.3862944
      %vm188 = vcmp.ge.f32.partialorder %v124, -1.3862944
      %vm189 = vcmp.ge.f32.partialorder %v125, -1.3862944
      %vm190 = vcmp.ge.f32.partialorder %v126, -1.3862944
      %vm191 = vcmp.ge.f32.partialorder %v127, -1.3862944
      %vm192 = vcmp.ge.f32.partialorder %v128, -1.3862944
      %vm193 = vcmp.ge.f32.partialorder %v129, -1.3862944
      %vm194 = vcmp.ge.f32.partialorder %v130, -1.3862944
      %vm195 = vcmp.ge.f32.partialorder %v131, -1.3862944
      %vm196 = vcmp.ge.f32.partialorder %v132, -1.3862944
      %vm197 = vcmp.ge.f32.partialorder %v133, -1.3862944
      %vm198 = vcmp.ge.f32.partialorder %v134, -1.3862944
      %vm199 = vcmp.ge.f32.partialorder %v135, -1.3862944
      %vm200 = vcmp.ge.f32.partialorder %v136, -1.3862944
      %vm201 = vcmp.ge.f32.partialorder %v137, -1.3862944
      %vm202 = vcmp.ge.f32.partialorder %v138, -1.3862944
      %vm203 = vcmp.ge.f32.partialorder %v139, -1.3862944
      %vm204 = vcmp.ge.f32.partialorder %v140, -1.3862944
      %vm205 = vcmp.ge.f32.partialorder %v141, -1.3862944
      %vm206 = vcmp.ge.f32.partialorder %v142, -1.3862944
      %vm207 = vcmp.ge.f32.partialorder %v143, -1.3862944
      %vm208 = vcmp.ge.f32.partialorder %v144, -1.3862944
      %vm209 = vcmp.ge.f32.partialorder %v145, -1.3862944
      %vm210 = vcmp.ge.f32.partialorder %v146, -1.3862944
      %vm211 = vcmp.ge.f32.partialorder %v147, -1.3862944
      %vm212 = vcmp.ge.f32.partialorder %v148, -1.3862944
      %vm213 = vcmp.ge.f32.partialorder %v149, -1.3862944
      %vm214 = vcmp.ge.f32.partialorder %v150, -1.3862944
      %v215 = vsel %vm151, 1, 0
      %v216 = vsel %vm152, 1, 0
      %v217 = vsel %vm153, 1, 0
      %v218 = vsel %vm154, 1, 0
      %v219 = vsel %vm155, 1, 0
      %v220 = vsel %vm156, 1, 0
      %v221 = vsel %vm157, 1, 0
      %v222 = vsel %vm158, 1, 0
      %v223 = vsel %vm159, 1, 0
      %v224 = vsel %vm160, 1, 0
      %v225 = vsel %vm161, 1, 0
      %v226 = vsel %vm162, 1, 0
      %v227 = vsel %vm163, 1, 0
      %v228 = vsel %vm164, 1, 0
      %v229 = vsel %vm165, 1, 0
      %v230 = vsel %vm166, 1, 0
      %v231 = vsel %vm167, 1, 0
      %v232 = vsel %vm168, 1, 0
      %v233 = vsel %vm169, 1, 0
      %v234 = vsel %vm170, 1, 0
      %v235 = vsel %vm171, 1, 0
      %v236 = vsel %vm172, 1, 0
      %v237 = vsel %vm173, 1, 0
      %v238 = vsel %vm174, 1, 0
      %v239 = vsel %vm175, 1, 0
      %v240 = vsel %vm176, 1, 0
      %v241 = vsel %vm177, 1, 0
      %v242 = vsel %vm178, 1, 0
      %v243 = vsel %vm179, 1, 0
      %v244 = vsel %vm180, 1, 0
      %v245 = vsel %vm181, 1, 0
      %v246 = vsel %vm182, 1, 0
      %v247 = vsel %vm183, 1, 0
      %v248 = vsel %vm184, 1, 0
      %v249 = vsel %vm185, 1, 0
      %v250 = vsel %vm186, 1, 0
      %v251 = vsel %vm187, 1, 0
      %v252 = vsel %vm188, 1, 0
      %v253 = vsel %vm189, 1, 0
      %v254 = vsel %vm190, 1, 0
      %v255 = vsel %vm191, 1, 0
      %v256 = vsel %vm192, 1, 0
      %v257 = vsel %vm193, 1, 0
      %v258 = vsel %vm194, 1, 0
      %v259 = vsel %vm195, 1, 0
      %v260 = vsel %vm196, 1, 0
      %v261 = vsel %vm197, 1, 0
      %v262 = vsel %vm198, 1, 0
      %v263 = vsel %vm199, 1, 0
      %v264 = vsel %vm200, 1, 0
      %v265 = vsel %vm201, 1, 0
      %v266 = vsel %vm202, 1, 0
      %v267 = vsel %vm203, 1, 0
      %v268 = vsel %vm204, 1, 0
      %v269 = vsel %vm205, 1, 0
      %v270 = vsel %vm206, 1, 0
      %v271 = vsel %vm207, 1, 0
      %v272 = vsel %vm208, 1, 0
      %v273 = vsel %vm209, 1, 0
      %v274 = vsel %vm210, 1, 0
      %v275 = vsel %vm211, 1, 0
      %v276 = vsel %vm212, 1, 0
      %v277 = vsel %vm213, 1, 0
      %v278 = vsel %vm214, 1, 0
      %v279 = vld [vmem:[%s71] sm:$0xff]
      %v280 = vld [vmem:[%s71 + $0x8] sm:$0xff]
      %v281 = vld [vmem:[%s71 + $0x10] sm:$0xff]
      %v282 = vld [vmem:[%s71 + $0x18] sm:$0xff]
      %v283 = vld [vmem:[%s71 + $0x20] sm:$0xff]
      %v284 = vld [vmem:[%s71 + $0x28] sm:$0xff]
      %v285 = vld [vmem:[%s71 + $0x30] sm:$0xff]
      %v286 = vld [vmem:[%s71 + $0x38] sm:$0xff]
      %v287 = vld [vmem:[%s71 + $0x40] sm:$0xff]
      %v288 = vld [vmem:[%s71 + $0x48] sm:$0xff]
      %v289 = vld [vmem:[%s71 + $0x50] sm:$0xff]
      %v290 = vld [vmem:[%s71 + $0x58] sm:$0xff]
      %v291 = vld [vmem:[%s71 + $0x60] sm:$0xff]
      %v292 = vld [vmem:[%s71 + $0x68] sm:$0xff]
      %v293 = vld [vmem:[%s71 + $0x70] sm:$0xff]
      %v294 = vld [vmem:[%s71 + $0x78] sm:$0xff]
      %v295 = vld [vmem:[%s71 + $0x80] sm:$0xff]
      %v296 = vld [vmem:[%s71 + $0x88] sm:$0xff]
      %v297 = vld [vmem:[%s71 + $0x90] sm:$0xff]
      %v298 = vld [vmem:[%s71 + $0x98] sm:$0xff]
      %v299 = vld [vmem:[%s71 + $0xa0] sm:$0xff]
      %v300 = vld [vmem:[%s71 + $0xa8] sm:$0xff]
      %v301 = vld [vmem:[%s71 + $0xb0] sm:$0xff]
      %v302 = vld [vmem:[%s71 + $0xb8] sm:$0xff]
      %v303 = vld [vmem:[%s71 + $0xc0] sm:$0xff]
      %v304 = vld [vmem:[%s71 + $0xc8] sm:$0xff]
      %v305 = vld [vmem:[%s71 + $0xd0] sm:$0xff]
      %v306 = vld [vmem:[%s71 + $0xd8] sm:$0xff]
      %v307 = vld [vmem:[%s71 + $0xe0] sm:$0xff]
      %v308 = vld [vmem:[%s71 + $0xe8] sm:$0xff]
      %v309 = vld [vmem:[%s71 + $0xf0] sm:$0xff]
      %v310 = vld [vmem:[%s71 + $0xf8] sm:$0xff]
      %v311 = vld [vmem:[%s71 + $0x100] sm:$0xff]
      %v312 = vld [vmem:[%s71 + $0x108] sm:$0xff]
      %v313 = vld [vmem:[%s71 + $0x110] sm:$0xff]
      %v314 = vld [vmem:[%s71 + $0x118] sm:$0xff]
      %v315 = vld [vmem:[%s71 + $0x120] sm:$0xff]
      %v316 = vld [vmem:[%s71 + $0x128] sm:$0xff]
      %v317 = vld [vmem:[%s71 + $0x130] sm:$0xff]
      %v318 = vld [vmem:[%s71 + $0x138] sm:$0xff]
      %v319 = vld [vmem:[%s71 + $0x140] sm:$0xff]
      %v320 = vld [vmem:[%s71 + $0x148] sm:$0xff]
      %v321 = vld [vmem:[%s71 + $0x150] sm:$0xff]
      %v322 = vld [vmem:[%s71 + $0x158] sm:$0xff]
      %v323 = vld [vmem:[%s71 + $0x160] sm:$0xff]
      %v324 = vld [vmem:[%s71 + $0x168] sm:$0xff]
      %v325 = vld [vmem:[%s71 + $0x170] sm:$0xff]
      %v326 = vld [vmem:[%s71 + $0x178] sm:$0xff]
      %v327 = vld [vmem:[%s71 + $0x180] sm:$0xff]
      %v328 = vld [vmem:[%s71 + $0x188] sm:$0xff]
      %v329 = vld [vmem:[%s71 + $0x190] sm:$0xff]
      %v330 = vld [vmem:[%s71 + $0x198] sm:$0xff]
      %v331 = vld [vmem:[%s71 + $0x1a0] sm:$0xff]
      %v332 = vld [vmem:[%s71 + $0x1a8] sm:$0xff]
      %v333 = vld [vmem:[%s71 + $0x1b0] sm:$0xff]
      %v334 = vld [vmem:[%s71 + $0x1b8] sm:$0xff]
      %v335 = vld [vmem:[%s71 + $0x1c0] sm:$0xff]
      %v336 = vld [vmem:[%s71 + $0x1c8] sm:$0xff]
      %v337 = vld [vmem:[%s71 + $0x1d0] sm:$0xff]
      %v338 = vld [vmem:[%s71 + $0x1d8] sm:$0xff]
      %v339 = vld [vmem:[%s71 + $0x1e0] sm:$0xff]
      %v340 = vld [vmem:[%s71 + $0x1e8] sm:$0xff]
      %v341 = vld [vmem:[%s71 + $0x1f0] sm:$0xff]
      %v342 = vld [vmem:[%s71 + $0x1f8] sm:$0xff]
      %v343 = vcvt.f32.s32.to.zero.pseudo %v279
      %v344 = vcvt.f32.s32.to.zero.pseudo %v280
      %v345 = vcvt.f32.s32.to.zero.pseudo %v281
      %v346 = vcvt.f32.s32.to.zero.pseudo %v282
      %v347 = vcvt.f32.s32.to.zero.pseudo %v283
      %v348 = vcvt.f32.s32.to.zero.pseudo %v284
      %v349 = vcvt.f32.s32.to.zero.pseudo %v285
      %v350 = vcvt.f32.s32.to.zero.pseudo %v286
      %v351 = vcvt.f32.s32.to.zero.pseudo %v287
      %v352 = vcvt.f32.s32.to.zero.pseudo %v288
      %v353 = vcvt.f32.s32.to.zero.pseudo %v289
      %v354 = vcvt.f32.s32.to.zero.pseudo %v290
      %v355 = vcvt.f32.s32.to.zero.pseudo %v291
      %v356 = vcvt.f32.s32.to.zero.pseudo %v292
      %v357 = vcvt.f32.s32.to.zero.pseudo %v293
      %v358 = vcvt.f32.s32.to.zero.pseudo %v294
      %v359 = vcvt.f32.s32.to.zero.pseudo %v295
      %v360 = vcvt.f32.s32.to.zero.pseudo %v296
      %v361 = vcvt.f32.s32.to.zero.pseudo %v297
      %v362 = vcvt.f32.s32.to.zero.pseudo %v298
      %v363 = vcvt.f32.s32.to.zero.pseudo %v299
      %v364 = vcvt.f32.s32.to.zero.pseudo %v300
      %v365 = vcvt.f32.s32.to.zero.pseudo %v301
      %v366 = vcvt.f32.s32.to.zero.pseudo %v302
      %v367 = vcvt.f32.s32.to.zero.pseudo %v303
      %v368 = vcvt.f32.s32.to.zero.pseudo %v304
      %v369 = vcvt.f32.s32.to.zero.pseudo %v305
      %v370 = vcvt.f32.s32.to.zero.pseudo %v306
      %v371 = vcvt.f32.s32.to.zero.pseudo %v307
      %v372 = vcvt.f32.s32.to.zero.pseudo %v308
      %v373 = vcvt.f32.s32.to.zero.pseudo %v309
      %v374 = vcvt.f32.s32.to.zero.pseudo %v310
      %v375 = vcvt.f32.s32.to.zero.pseudo %v311
      %v376 = vcvt.f32.s32.to.zero.pseudo %v312
      %v377 = vcvt.f32.s32.to.zero.pseudo %v313
      %v378 = vcvt.f32.s32.to.zero.pseudo %v314
      %v379 = vcvt.f32.s32.to.zero.pseudo %v315
      %v380 = vcvt.f32.s32.to.zero.pseudo %v316
      %v381 = vcvt.f32.s32.to.zero.pseudo %v317
      %v382 = vcvt.f32.s32.to.zero.pseudo %v318
      %v383 = vcvt.f32.s32.to.zero.pseudo %v319
      %v384 = vcvt.f32.s32.to.zero.pseudo %v320
      %v385 = vcvt.f32.s32.to.zero.pseudo %v321
      %v386 = vcvt.f32.s32.to.zero.pseudo %v322
      %v387 = vcvt.f32.s32.to.zero.pseudo %v323
      %v388 = vcvt.f32.s32.to.zero.pseudo %v324
      %v389 = vcvt.f32.s32.to.zero.pseudo %v325
      %v390 = vcvt.f32.s32.to.zero.pseudo %v326
      %v391 = vcvt.f32.s32.to.zero.pseudo %v327
      %v392 = vcvt.f32.s32.to.zero.pseudo %v328
      %v393 = vcvt.f32.s32.to.zero.pseudo %v329
      %v394 = vcvt.f32.s32.to.zero.pseudo %v330
      %v395 = vcvt.f32.s32.to.zero.pseudo %v331
      %v396 = vcvt.f32.s32.to.zero.pseudo %v332
      %v397 = vcvt.f32.s32.to.zero.pseudo %v333
      %v398 = vcvt.f32.s32.to.zero.pseudo %v334
      %v399 = vcvt.f32.s32.to.zero.pseudo %v335
      %v400 = vcvt.f32.s32.to.zero.pseudo %v336
      %v401 = vcvt.f32.s32.to.zero.pseudo %v337
      %v402 = vcvt.f32.s32.to.zero.pseudo %v338
      %v403 = vcvt.f32.s32.to.zero.pseudo %v339
      %v404 = vcvt.f32.s32.to.zero.pseudo %v340
      %v405 = vcvt.f32.s32.to.zero.pseudo %v341
      %v406 = vcvt.f32.s32.to.zero.pseudo %v342
      %v407 = vand.u32 %v215, %v343
      %v408 = vand.u32 %v216, %v344
      %v409 = vand.u32 %v217, %v345
      %v410 = vand.u32 %v218, %v346
      %v411 = vand.u32 %v219, %v347
      %v412 = vand.u32 %v220, %v348
      %v413 = vand.u32 %v221, %v349
      %v414 = vand.u32 %v222, %v350
      %v415 = vand.u32 %v223, %v351
      %v416 = vand.u32 %v224, %v352
      %v417 = vand.u32 %v225, %v353
      %v418 = vand.u32 %v226, %v354
      %v419 = vand.u32 %v227, %v355
      %v420 = vand.u32 %v228, %v356
      %v421 = vand.u32 %v229, %v357
      %v422 = vand.u32 %v230, %v358
      %v423 = vand.u32 %v231, %v359
      %v424 = vand.u32 %v232, %v360
      %v425 = vand.u32 %v233, %v361
      %v426 = vand.u32 %v234, %v362
      %v427 = vand.u32 %v235, %v363
      %v428 = vand.u32 %v236, %v364
      %v429 = vand.u32 %v237, %v365
      %v430 = vand.u32 %v238, %v366
      %v431 = vand.u32 %v239, %v367
      %v432 = vand.u32 %v240, %v368
      %v433 = vand.u32 %v241, %v369
      %v434 = vand.u32 %v242, %v370
      %v435 = vand.u32 %v243, %v371
      %v436 = vand.u32 %v244, %v372
      %v437 = vand.u32 %v245, %v373
      %v438 = vand.u32 %v246, %v374
      %v439 = vand.u32 %v247, %v375
      %v440 = vand.u32 %v248, %v376
      %v441 = vand.u32 %v249, %v377
      %v442 = vand.u32 %v250, %v378
      %v443 = vand.u32 %v251, %v379
      %v444 = vand.u32 %v252, %v380
      %v445 = vand.u32 %v253, %v381
      %v446 = vand.u32 %v254, %v382
      %v447 = vand.u32 %v255, %v383
      %v448 = vand.u32 %v256, %v384
      %v449 = vand.u32 %v257, %v385
      %v450 = vand.u32 %v258, %v386
      %v451 = vand.u32 %v259, %v387
      %v452 = vand.u32 %v260, %v388
      %v453 = vand.u32 %v261, %v389
      %v454 = vand.u32 %v262, %v390
      %v455 = vand.u32 %v263, %v391
      %v456 = vand.u32 %v264, %v392
      %v457 = vand.u32 %v265, %v393
      %v458 = vand.u32 %v266, %v394
      %v459 = vand.u32 %v267, %v395
      %v460 = vand.u32 %v268, %v396
      %v461 = vand.u32 %v269, %v397
      %v462 = vand.u32 %v270, %v398
      %v463 = vand.u32 %v271, %v399
      %v464 = vand.u32 %v272, %v400
      %v465 = vand.u32 %v273, %v401
      %v466 = vand.u32 %v274, %v402
      %v467 = vand.u32 %v275, %v403
      %v468 = vand.u32 %v276, %v404
      %v469 = vand.u32 %v277, %v405
      %v470 = vand.u32 %v278, %v406
      %v471 = vor.u32 %v215, %v343
      %v472 = vor.u32 %v216, %v344
      %v473 = vor.u32 %v217, %v345
      %v474 = vor.u32 %v218, %v346
      %v475 = vor.u32 %v219, %v347
      %v476 = vor.u32 %v220, %v348
      %v477 = vor.u32 %v221, %v349
      %v478 = vor.u32 %v222, %v350
      %v479 = vor.u32 %v223, %v351
      %v480 = vor.u32 %v224, %v352
      %v481 = vor.u32 %v225, %v353
      %v482 = vor.u32 %v226, %v354
      %v483 = vor.u32 %v227, %v355
      %v484 = vor.u32 %v228, %v356
      %v485 = vor.u32 %v229, %v357
      %v486 = vor.u32 %v230, %v358
      %v487 = vor.u32 %v231, %v359
      %v488 = vor.u32 %v232, %v360
      %v489 = vor.u32 %v233, %v361
      %v490 = vor.u32 %v234, %v362
      %v491 = vor.u32 %v235, %v363
      %v492 = vor.u32 %v236, %v364
      %v493 = vor.u32 %v237, %v365
      %v494 = vor.u32 %v238, %v366
      %v495 = vor.u32 %v239, %v367
      %v496 = vor.u32 %v240, %v368
      %v497 = vor.u32 %v241, %v369
      %v498 = vor.u32 %v242, %v370
      %v499 = vor.u32 %v243, %v371
      %v500 = vor.u32 %v244, %v372
      %v501 = vor.u32 %v245, %v373
      %v502 = vor.u32 %v246, %v374
      %v503 = vor.u32 %v247, %v375
      %v504 = vor.u32 %v248, %v376
      %v505 = vor.u32 %v249, %v377
      %v506 = vor.u32 %v250, %v378
      %v507 = vor.u32 %v251, %v379
      %v508 = vor.u32 %v252, %v380
      %v509 = vor.u32 %v253, %v381
      %v510 = vor.u32 %v254, %v382
      %v511 = vor.u32 %v255, %v383
      %v512 = vor.u32 %v256, %v384
      %v513 = vor.u32 %v257, %v385
      %v514 = vor.u32 %v258, %v386
      %v515 = vor.u32 %v259, %v387
      %v516 = vor.u32 %v260, %v388
      %v517 = vor.u32 %v261, %v389
      %v518 = vor.u32 %v262, %v390
      %v519 = vor.u32 %v263, %v391
      %v520 = vor.u32 %v264, %v392
      %v521 = vor.u32 %v265, %v393
      %v522 = vor.u32 %v266, %v394
      %v523 = vor.u32 %v267, %v395
      %v524 = vor.u32 %v268, %v396
      %v525 = vor.u32 %v269, %v397
      %v526 = vor.u32 %v270, %v398
      %v527 = vor.u32 %v271, %v399
      %v528 = vor.u32 %v272, %v400
      %v529 = vor.u32 %v273, %v401
      %v530 = vor.u32 %v274, %v402
      %v531 = vor.u32 %v275, %v403
      %v532 = vor.u32 %v276, %v404
      %v533 = vor.u32 %v277, %v405
      %v534 = vor.u32 %v278, %v406
      %v535 = vld [vmem:[#allocation2] sm:$0xff]
      %v536 = vadd.s32 %v407, %v411
      %v537 = vadd.s32 %v408, %v412
      %v538 = vadd.s32 %v409, %v413
      %v539 = vadd.s32 %v410, %v414
      %v540 = vadd.s32 %v536, %v415
      %v541 = vadd.s32 %v537, %v416
      %v542 = vadd.s32 %v538, %v417
      %v543 = vadd.s32 %v539, %v418
      %v544 = vadd.s32 %v540, %v419
      %v545 = vadd.s32 %v541, %v420
      %v546 = vadd.s32 %v542, %v421
      %v547 = vadd.s32 %v543, %v422
      %v548 = vadd.s32 %v544, %v423
      %v549 = vadd.s32 %v545, %v424
      %v550 = vadd.s32 %v546, %v425
      %v551 = vadd.s32 %v547, %v426
      %v552 = vadd.s32 %v548, %v427
      %v553 = vadd.s32 %v549, %v428
      %v554 = vadd.s32 %v550, %v429
      %v555 = vadd.s32 %v551, %v430
      %v556 = vadd.s32 %v552, %v431
      %v557 = vadd.s32 %v553, %v432
      %v558 = vadd.s32 %v554, %v433
      %v559 = vadd.s32 %v555, %v434
      %v560 = vadd.s32 %v556, %v435
      %v561 = vadd.s32 %v557, %v436
      %v562 = vadd.s32 %v558, %v437
      %v563 = vadd.s32 %v559, %v438
      %v564 = vadd.s32 %v560, %v439
      %v565 = vadd.s32 %v561, %v440
      %v566 = vadd.s32 %v562, %v441
      %v567 = vadd.s32 %v563, %v442
      %v568 = vadd.s32 %v564, %v443
      %v569 = vadd.s32 %v565, %v444
      %v570 = vadd.s32 %v566, %v445
      %v571 = vadd.s32 %v567, %v446
      %v572 = vadd.s32 %v568, %v447
      %v573 = vadd.s32 %v569, %v448
      %v574 = vadd.s32 %v570, %v449
      %v575 = vadd.s32 %v571, %v450
      %v576 = vadd.s32 %v572, %v451
      %v577 = vadd.s32 %v573, %v452
      %v578 = vadd.s32 %v574, %v453
      %v579 = vadd.s32 %v575, %v454
      %v580 = vadd.s32 %v576, %v455
      %v581 = vadd.s32 %v577, %v456
      %v582 = vadd.s32 %v578, %v457
      %v583 = vadd.s32 %v579, %v458
      %v584 = vadd.s32 %v580, %v459
      %v585 = vadd.s32 %v581, %v460
      %v586 = vadd.s32 %v582, %v461
      %v587 = vadd.s32 %v583, %v462
      %v588 = vadd.s32 %v584, %v463
      %v589 = vadd.s32 %v585, %v464
      %v590 = vadd.s32 %v586, %v465
      %v591 = vadd.s32 %v587, %v466
      %v592 = vadd.s32 %v588, %v467
      %v593 = vadd.s32 %v589, %v468
      %v594 = vadd.s32 %v590, %v469
      %v595 = vadd.s32 %v591, %v470
      %v596 = vadd.s32 %v592, %v593
      %v597 = vadd.s32 %v594, %v595
      %v598 = vadd.s32 %v596, %v597
      %v599 = vadd.s32 %v535, %v598
      %600 = vst [vmem:[#allocation2] sm:$0xff] %v599
      %s601 = scalar_lea.vmem [#allocation2], 8
      %v602 = vld [vmem:[%s601] sm:$0xff]
      %v603 = vadd.s32 %v471, %v475
      %v604 = vadd.s32 %v472, %v476
      %v605 = vadd.s32 %v473, %v477
      %v606 = vadd.s32 %v474, %v478
      %v607 = vadd.s32 %v603, %v479
      %v608 = vadd.s32 %v604, %v480
      %v609 = vadd.s32 %v605, %v481
      %v610 = vadd.s32 %v606, %v482
      %v611 = vadd.s32 %v607, %v483
      %v612 = vadd.s32 %v608, %v484
      %v613 = vadd.s32 %v609, %v485
      %v614 = vadd.s32 %v610, %v486
      %v615 = vadd.s32 %v611, %v487
      %v616 = vadd.s32 %v612, %v488
      %v617 = vadd.s32 %v613, %v489
      %v618 = vadd.s32 %v614, %v490
      %v619 = vadd.s32 %v615, %v491
      %v620 = vadd.s32 %v616, %v492
      %v621 = vadd.s32 %v617, %v493
      %v622 = vadd.s32 %v618, %v494
      %v623 = vadd.s32 %v619, %v495
      %v624 = vadd.s32 %v620, %v496
      %v625 = vadd.s32 %v621, %v497
      %v626 = vadd.s32 %v622, %v498
      %v627 = vadd.s32 %v623, %v499
      %v628 = vadd.s32 %v624, %v500
      %v629 = vadd.s32 %v625, %v501
      %v630 = vadd.s32 %v626, %v502
      %v631 = vadd.s32 %v627, %v503
      %v632 = vadd.s32 %v628, %v504
      %v633 = vadd.s32 %v629, %v505
      %v634 = vadd.s32 %v630, %v506
      %v635 = vadd.s32 %v631, %v507
      %v636 = vadd.s32 %v632, %v508
      %v637 = vadd.s32 %v633, %v509
      %v638 = vadd.s32 %v634, %v510
      %v639 = vadd.s32 %v635, %v511
      %v640 = vadd.s32 %v636, %v512
      %v641 = vadd.s32 %v637, %v513
      %v642 = vadd.s32 %v638, %v514
      %v643 = vadd.s32 %v639, %v515
      %v644 = vadd.s32 %v640, %v516
      %v645 = vadd.s32 %v641, %v517
      %v646 = vadd.s32 %v642, %v518
      %v647 = vadd.s32 %v643, %v519
      %v648 = vadd.s32 %v644, %v520
      %v649 = vadd.s32 %v645, %v521
      %v650 = vadd.s32 %v646, %v522
      %v651 = vadd.s32 %v647, %v523
      %v652 = vadd.s32 %v648, %v524
      %v653 = vadd.s32 %v649, %v525
      %v654 = vadd.s32 %v650, %v526
      %v655 = vadd.s32 %v651, %v527
      %v656 = vadd.s32 %v652, %v528
      %v657 = vadd.s32 %v653, %v529
      %v658 = vadd.s32 %v654, %v530
      %v659 = vadd.s32 %v655, %v531
      %v660 = vadd.s32 %v656, %v532
      %v661 = vadd.s32 %v657, %v533
      %v662 = vadd.s32 %v658, %v534
      %v663 = vadd.s32 %v659, %v660
      %v664 = vadd.s32 %v661, %v662
      %v665 = vadd.s32 %v663, %v664
      %v666 = vadd.s32 %v602, %v665
      %667 = vst [vmem:[%s601] sm:$0xff] %v666
    $region17: #{loss_iou.1} parent=1 // pred_fallthru
      _
    %p668 = scmp.eq.s32.totalorder %s76, 0
    // Predicated region
    $region18: #{loss_iou.1} parent=1 // pred_check
      %p669 = pneg %p668
    $region19: #{loss_iou.1} parent=1 // pred_check_branch
      %671 = sbr.rel (%p669) target = $region21
    $region20: #{loss_iou.1} parent=1 // pred_region
      %v672 = vld [vmem:[%s59] sm:$0xff]
      %v673 = vld [vmem:[%s59 + $0x8] sm:$0xff]
      %v674 = vld [vmem:[%s59 + $0x10] sm:$0xff]
      %v675 = vld [vmem:[%s59 + $0x18] sm:$0xff]
      %v676 = vld [vmem:[%s59 + $0x20] sm:$0xff]
      %v677 = vld [vmem:[%s59 + $0x28] sm:$0xff]
      %v678 = vld [vmem:[%s59 + $0x30] sm:$0xff]
      %v679 = vld [vmem:[%s59 + $0x38] sm:$0xff]
      %v680 = vld [vmem:[%s59 + $0x40] sm:$0xff]
      %v681 = vld [vmem:[%s59 + $0x48] sm:$0xff]
      %v682 = vld [vmem:[%s59 + $0x50] sm:$0xff]
      %v683 = vld [vmem:[%s59 + $0x58] sm:$0xff]
      %v684 = vld [vmem:[%s59 + $0x60] sm:$0xff]
      %v685 = vld [vmem:[%s59 + $0x68] sm:$0xff]
      %v686 = vld [vmem:[%s59 + $0x70] sm:$0xff]
      %v687 = vld [vmem:[%s59 + $0x78] sm:$0xff]
      %v688 = vld [vmem:[%s59 + $0x80] sm:$0xff]
      %v689 = vld [vmem:[%s59 + $0x88] sm:$0xff]
      %v690 = vld [vmem:[%s59 + $0x90] sm:$0xff]
      %v691 = vld [vmem:[%s59 + $0x98] sm:$0xff]
      %v692 = vld [vmem:[%s59 + $0xa0] sm:$0xff]
      %v693 = vld [vmem:[%s59 + $0xa8] sm:$0xff]
      %v694 = vld [vmem:[%s59 + $0xb0] sm:$0xff]
      %v695 = vld [vmem:[%s59 + $0xb8] sm:$0xff]
      %v696 = vld [vmem:[%s59 + $0xc0] sm:$0xff]
      %v697 = vld [vmem:[%s59 + $0xc8] sm:$0xff]
      %v698 = vld [vmem:[%s59 + $0xd0] sm:$0xff]
      %v699 = vld [vmem:[%s59 + $0xd8] sm:$0xff]
      %v700 = vld [vmem:[%s59 + $0xe0] sm:$0xff]
      %v701 = vld [vmem:[%s59 + $0xe8] sm:$0xff]
      %v702 = vld [vmem:[%s59 + $0xf0] sm:$0xff]
      %v703 = vld [vmem:[%s59 + $0xf8] sm:$0xff]
      %v704 = vld [vmem:[%s59 + $0x100] sm:$0xff]
      %v705 = vld [vmem:[%s59 + $0x108] sm:$0xff]
      %v706 = vld [vmem:[%s59 + $0x110] sm:$0xff]
      %v707 = vld [vmem:[%s59 + $0x118] sm:$0xff]
      %v708 = vld [vmem:[%s59 + $0x120] sm:$0xff]
      %v709 = vld [vmem:[%s59 + $0x128] sm:$0xff]
      %v710 = vld [vmem:[%s59 + $0x130] sm:$0xff]
      %v711 = vld [vmem:[%s59 + $0x138] sm:$0xff]
      %v712 = vld [vmem:[%s59 + $0x140] sm:$0xff]
      %v713 = vld [vmem:[%s59 + $0x148] sm:$0xff]
      %v714 = vld [vmem:[%s59 + $0x150] sm:$0xff]
      %v715 = vld [vmem:[%s59 + $0x158] sm:$0xff]
      %v716 = vld [vmem:[%s59 + $0x160] sm:$0xff]
      %v717 = vld [vmem:[%s59 + $0x168] sm:$0xff]
      %v718 = vld [vmem:[%s59 + $0x170] sm:$0xff]
      %v719 = vld [vmem:[%s59 + $0x178] sm:$0xff]
      %v720 = vld [vmem:[%s59 + $0x180] sm:$0xff]
      %v721 = vld [vmem:[%s59 + $0x188] sm:$0xff]
      %v722 = vld [vmem:[%s59 + $0x190] sm:$0xff]
      %v723 = vld [vmem:[%s59 + $0x198] sm:$0xff]
      %v724 = vld [vmem:[%s59 + $0x1a0] sm:$0xff]
      %v725 = vld [vmem:[%s59 + $0x1a8] sm:$0xff]
      %v726 = vld [vmem:[%s59 + $0x1b0] sm:$0xff]
      %v727 = vld [vmem:[%s59 + $0x1b8] sm:$0xff]
      %v728 = vld [vmem:[%s59 + $0x1c0] sm:$0xff]
      %v729 = vld [vmem:[%s59 + $0x1c8] sm:$0xff]
      %v730 = vld [vmem:[%s59 + $0x1d0] sm:$0xff]
      %v731 = vld [vmem:[%s59 + $0x1d8] sm:$0xff]
      %v732 = vld [vmem:[%s59 + $0x1e0] sm:$0xff]
      %v733 = vld [vmem:[%s59 + $0x1e8] sm:$0xff]
      %v734 = vld [vmem:[%s59 + $0x1f0] sm:$0xff]
      %v735 = vld [vmem:[%s59 + $0x1f8] sm:$0xff]
      %vm736 = vcmp.ge.f32.partialorder %v672, -1.3862944
      %vm737 = vcmp.ge.f32.partialorder %v673, -1.3862944
      %vm738 = vcmp.ge.f32.partialorder %v674, -1.3862944
      %vm739 = vcmp.ge.f32.partialorder %v675, -1.3862944
      %vm740 = vcmp.ge.f32.partialorder %v676, -1.3862944
      %vm741 = vcmp.ge.f32.partialorder %v677, -1.3862944
      %vm742 = vcmp.ge.f32.partialorder %v678, -1.3862944
      %vm743 = vcmp.ge.f32.partialorder %v679, -1.3862944
      %vm744 = vcmp.ge.f32.partialorder %v680, -1.3862944
      %vm745 = vcmp.ge.f32.partialorder %v681, -1.3862944
      %vm746 = vcmp.ge.f32.partialorder %v682, -1.3862944
      %vm747 = vcmp.ge.f32.partialorder %v683, -1.3862944
      %vm748 = vcmp.ge.f32.partialorder %v684, -1.3862944
      %vm749 = vcmp.ge.f32.partialorder %v685, -1.3862944
      %vm750 = vcmp.ge.f32.partialorder %v686, -1.3862944
      %vm751 = vcmp.ge.f32.partialorder %v687, -1.3862944
      %vm752 = vcmp.ge.f32.partialorder %v688, -1.3862944
      %vm753 = vcmp.ge.f32.partialorder %v689, -1.3862944
      %vm754 = vcmp.ge.f32.partialorder %v690, -1.3862944
      %vm755 = vcmp.ge.f32.partialorder %v691, -1.3862944
      %vm756 = vcmp.ge.f32.partialorder %v692, -1.3862944
      %vm757 = vcmp.ge.f32.partialorder %v693, -1.3862944
      %vm758 = vcmp.ge.f32.partialorder %v694, -1.3862944
      %vm759 = vcmp.ge.f32.partialorder %v695, -1.3862944
      %vm760 = vcmp.ge.f32.partialorder %v696, -1.3862944
      %vm761 = vcmp.ge.f32.partialorder %v697, -1.3862944
      %vm762 = vcmp.ge.f32.partialorder %v698, -1.3862944
      %vm763 = vcmp.ge.f32.partialorder %v699, -1.3862944
      %vm764 = vcmp.ge.f32.partialorder %v700, -1.3862944
      %vm765 = vcmp.ge.f32.partialorder %v701, -1.3862944
      %vm766 = vcmp.ge.f32.partialorder %v702, -1.3862944
      %vm767 = vcmp.ge.f32.partialorder %v703, -1.3862944
      %vm768 = vcmp.ge.f32.partialorder %v704, -1.3862944
      %vm769 = vcmp.ge.f32.partialorder %v705, -1.3862944
      %vm770 = vcmp.ge.f32.partialorder %v706, -1.3862944
      %vm771 = vcmp.ge.f32.partialorder %v707, -1.3862944
      %vm772 = vcmp.ge.f32.partialorder %v708, -1.3862944
      %vm773 = vcmp.ge.f32.partialorder %v709, -1.3862944
      %vm774 = vcmp.ge.f32.partialorder %v710, -1.3862944
      %vm775 = vcmp.ge.f32.partialorder %v711, -1.3862944
      %vm776 = vcmp.ge.f32.partialorder %v712, -1.3862944
      %vm777 = vcmp.ge.f32.partialorder %v713, -1.3862944
      %vm778 = vcmp.ge.f32.partialorder %v714, -1.3862944
      %vm779 = vcmp.ge.f32.partialorder %v715, -1.3862944
      %vm780 = vcmp.ge.f32.partialorder %v716, -1.3862944
      %vm781 = vcmp.ge.f32.partialorder %v717, -1.3862944
      %vm782 = vcmp.ge.f32.partialorder %v718, -1.3862944
      %vm783 = vcmp.ge.f32.partialorder %v719, -1.3862944
      %vm784 = vcmp.ge.f32.partialorder %v720, -1.3862944
      %vm785 = vcmp.ge.f32.partialorder %v721, -1.3862944
      %vm786 = vcmp.ge.f32.partialorder %v722, -1.3862944
      %vm787 = vcmp.ge.f32.partialorder %v723, -1.3862944
      %vm788 = vcmp.ge.f32.partialorder %v724, -1.3862944
      %vm789 = vcmp.ge.f32.partialorder %v725, -1.3862944
      %vm790 = vcmp.ge.f32.partialorder %v726, -1.3862944
      %vm791 = vcmp.ge.f32.partialorder %v727, -1.3862944
      %vm792 = vcmp.ge.f32.partialorder %v728, -1.3862944
      %vm793 = vcmp.ge.f32.partialorder %v729, -1.3862944
      %vm794 = vcmp.ge.f32.partialorder %v730, -1.3862944
      %vm795 = vcmp.ge.f32.partialorder %v731, -1.3862944
      %vm796 = vcmp.ge.f32.partialorder %v732, -1.3862944
      %vm797 = vcmp.ge.f32.partialorder %v733, -1.3862944
      %vm798 = vcmp.ge.f32.partialorder %v734, -1.3862944
      %vm799 = vcmp.ge.f32.partialorder %v735, -1.3862944
      %v800 = vsel %vm736, 1, 0
      %v801 = vsel %vm737, 1, 0
      %v802 = vsel %vm738, 1, 0
      %v803 = vsel %vm739, 1, 0
      %v804 = vsel %vm740, 1, 0
      %v805 = vsel %vm741, 1, 0
      %v806 = vsel %vm742, 1, 0
      %v807 = vsel %vm743, 1, 0
      %v808 = vsel %vm744, 1, 0
      %v809 = vsel %vm745, 1, 0
      %v810 = vsel %vm746, 1, 0
      %v811 = vsel %vm747, 1, 0
      %v812 = vsel %vm748, 1, 0
      %v813 = vsel %vm749, 1, 0
      %v814 = vsel %vm750, 1, 0
      %v815 = vsel %vm751, 1, 0
      %v816 = vsel %vm752, 1, 0
      %v817 = vsel %vm753, 1, 0
      %v818 = vsel %vm754, 1, 0
      %v819 = vsel %vm755, 1, 0
      %v820 = vsel %vm756, 1, 0
      %v821 = vsel %vm757, 1, 0
      %v822 = vsel %vm758, 1, 0
      %v823 = vsel %vm759, 1, 0
      %v824 = vsel %vm760, 1, 0
      %v825 = vsel %vm761, 1, 0
      %v826 = vsel %vm762, 1, 0
      %v827 = vsel %vm763, 1, 0
      %v828 = vsel %vm764, 1, 0
      %v829 = vsel %vm765, 1, 0
      %v830 = vsel %vm766, 1, 0
      %v831 = vsel %vm767, 1, 0
      %v832 = vsel %vm768, 1, 0
      %v833 = vsel %vm769, 1, 0
      %v834 = vsel %vm770, 1, 0
      %v835 = vsel %vm771, 1, 0
      %v836 = vsel %vm772, 1, 0
      %v837 = vsel %vm773, 1, 0
      %v838 = vsel %vm774, 1, 0
      %v839 = vsel %vm775, 1, 0
      %v840 = vsel %vm776, 1, 0
      %v841 = vsel %vm777, 1, 0
      %v842 = vsel %vm778, 1, 0
      %v843 = vsel %vm779, 1, 0
      %v844 = vsel %vm780, 1, 0
      %v845 = vsel %vm781, 1, 0
      %v846 = vsel %vm782, 1, 0
      %v847 = vsel %vm783, 1, 0
      %v848 = vsel %vm784, 1, 0
      %v849 = vsel %vm785, 1, 0
      %v850 = vsel %vm786, 1, 0
      %v851 = vsel %vm787, 1, 0
      %v852 = vsel %vm788, 1, 0
      %v853 = vsel %vm789, 1, 0
      %v854 = vsel %vm790, 1, 0
      %v855 = vsel %vm791, 1, 0
      %v856 = vsel %vm792, 1, 0
      %v857 = vsel %vm793, 1, 0
      %v858 = vsel %vm794, 1, 0
      %v859 = vsel %vm795, 1, 0
      %v860 = vsel %vm796, 1, 0
      %v861 = vsel %vm797, 1, 0
      %v862 = vsel %vm798, 1, 0
      %v863 = vsel %vm799, 1, 0
      %v864 = vld [vmem:[%s71] sm:$0xff]
      %v865 = vld [vmem:[%s71 + $0x8] sm:$0xff]
      %v866 = vld [vmem:[%s71 + $0x10] sm:$0xff]
      %v867 = vld [vmem:[%s71 + $0x18] sm:$0xff]
      %v868 = vld [vmem:[%s71 + $0x20] sm:$0xff]
      %v869 = vld [vmem:[%s71 + $0x28] sm:$0xff]
      %v870 = vld [vmem:[%s71 + $0x30] sm:$0xff]
      %v871 = vld [vmem:[%s71 + $0x38] sm:$0xff]
      %v872 = vld [vmem:[%s71 + $0x40] sm:$0xff]
      %v873 = vld [vmem:[%s71 + $0x48] sm:$0xff]
      %v874 = vld [vmem:[%s71 + $0x50] sm:$0xff]
      %v875 = vld [vmem:[%s71 + $0x58] sm:$0xff]
      %v876 = vld [vmem:[%s71 + $0x60] sm:$0xff]
      %v877 = vld [vmem:[%s71 + $0x68] sm:$0xff]
      %v878 = vld [vmem:[%s71 + $0x70] sm:$0xff]
      %v879 = vld [vmem:[%s71 + $0x78] sm:$0xff]
      %v880 = vld [vmem:[%s71 + $0x80] sm:$0xff]
      %v881 = vld [vmem:[%s71 + $0x88] sm:$0xff]
      %v882 = vld [vmem:[%s71 + $0x90] sm:$0xff]
      %v883 = vld [vmem:[%s71 + $0x98] sm:$0xff]
      %v884 = vld [vmem:[%s71 + $0xa0] sm:$0xff]
      %v885 = vld [vmem:[%s71 + $0xa8] sm:$0xff]
      %v886 = vld [vmem:[%s71 + $0xb0] sm:$0xff]
      %v887 = vld [vmem:[%s71 + $0xb8] sm:$0xff]
      %v888 = vld [vmem:[%s71 + $0xc0] sm:$0xff]
      %v889 = vld [vmem:[%s71 + $0xc8] sm:$0xff]
      %v890 = vld [vmem:[%s71 + $0xd0] sm:$0xff]
      %v891 = vld [vmem:[%s71 + $0xd8] sm:$0xff]
      %v892 = vld [vmem:[%s71 + $0xe0] sm:$0xff]
      %v893 = vld [vmem:[%s71 + $0xe8] sm:$0xff]
      %v894 = vld [vmem:[%s71 + $0xf0] sm:$0xff]
      %v895 = vld [vmem:[%s71 + $0xf8] sm:$0xff]
      %v896 = vld [vmem:[%s71 + $0x100] sm:$0xff]
      %v897 = vld [vmem:[%s71 + $0x108] sm:$0xff]
      %v898 = vld [vmem:[%s71 + $0x110] sm:$0xff]
      %v899 = vld [vmem:[%s71 + $0x118] sm:$0xff]
      %v900 = vld [vmem:[%s71 + $0x120] sm:$0xff]
      %v901 = vld [vmem:[%s71 + $0x128] sm:$0xff]
      %v902 = vld [vmem:[%s71 + $0x130] sm:$0xff]
      %v903 = vld [vmem:[%s71 + $0x138] sm:$0xff]
      %v904 = vld [vmem:[%s71 + $0x140] sm:$0xff]
      %v905 = vld [vmem:[%s71 + $0x148] sm:$0xff]
      %v906 = vld [vmem:[%s71 + $0x150] sm:$0xff]
      %v907 = vld [vmem:[%s71 + $0x158] sm:$0xff]
      %v908 = vld [vmem:[%s71 + $0x160] sm:$0xff]
      %v909 = vld [vmem:[%s71 + $0x168] sm:$0xff]
      %v910 = vld [vmem:[%s71 + $0x170] sm:$0xff]
      %v911 = vld [vmem:[%s71 + $0x178] sm:$0xff]
      %v912 = vld [vmem:[%s71 + $0x180] sm:$0xff]
      %v913 = vld [vmem:[%s71 + $0x188] sm:$0xff]
      %v914 = vld [vmem:[%s71 + $0x190] sm:$0xff]
      %v915 = vld [vmem:[%s71 + $0x198] sm:$0xff]
      %v916 = vld [vmem:[%s71 + $0x1a0] sm:$0xff]
      %v917 = vld [vmem:[%s71 + $0x1a8] sm:$0xff]
      %v918 = vld [vmem:[%s71 + $0x1b0] sm:$0xff]
      %v919 = vld [vmem:[%s71 + $0x1b8] sm:$0xff]
      %v920 = vld [vmem:[%s71 + $0x1c0] sm:$0xff]
      %v921 = vld [vmem:[%s71 + $0x1c8] sm:$0xff]
      %v922 = vld [vmem:[%s71 + $0x1d0] sm:$0xff]
      %v923 = vld [vmem:[%s71 + $0x1d8] sm:$0xff]
      %v924 = vld [vmem:[%s71 + $0x1e0] sm:$0xff]
      %v925 = vld [vmem:[%s71 + $0x1e8] sm:$0xff]
      %v926 = vld [vmem:[%s71 + $0x1f0] sm:$0xff]
      %v927 = vld [vmem:[%s71 + $0x1f8] sm:$0xff]
      %v928 = vcvt.f32.s32.to.zero.pseudo %v864
      %v929 = vcvt.f32.s32.to.zero.pseudo %v865
      %v930 = vcvt.f32.s32.to.zero.pseudo %v866
      %v931 = vcvt.f32.s32.to.zero.pseudo %v867
      %v932 = vcvt.f32.s32.to.zero.pseudo %v868
      %v933 = vcvt.f32.s32.to.zero.pseudo %v869
      %v934 = vcvt.f32.s32.to.zero.pseudo %v870
      %v935 = vcvt.f32.s32.to.zero.pseudo %v871
      %v936 = vcvt.f32.s32.to.zero.pseudo %v872
      %v937 = vcvt.f32.s32.to.zero.pseudo %v873
      %v938 = vcvt.f32.s32.to.zero.pseudo %v874
      %v939 = vcvt.f32.s32.to.zero.pseudo %v875
      %v940 = vcvt.f32.s32.to.zero.pseudo %v876
      %v941 = vcvt.f32.s32.to.zero.pseudo %v877
      %v942 = vcvt.f32.s32.to.zero.pseudo %v878
      %v943 = vcvt.f32.s32.to.zero.pseudo %v879
      %v944 = vcvt.f32.s32.to.zero.pseudo %v880
      %v945 = vcvt.f32.s32.to.zero.pseudo %v881
      %v946 = vcvt.f32.s32.to.zero.pseudo %v882
      %v947 = vcvt.f32.s32.to.zero.pseudo %v883
      %v948 = vcvt.f32.s32.to.zero.pseudo %v884
      %v949 = vcvt.f32.s32.to.zero.pseudo %v885
      %v950 = vcvt.f32.s32.to.zero.pseudo %v886
      %v951 = vcvt.f32.s32.to.zero.pseudo %v887
      %v952 = vcvt.f32.s32.to.zero.pseudo %v888
      %v953 = vcvt.f32.s32.to.zero.pseudo %v889
      %v954 = vcvt.f32.s32.to.zero.pseudo %v890
      %v955 = vcvt.f32.s32.to.zero.pseudo %v891
      %v956 = vcvt.f32.s32.to.zero.pseudo %v892
      %v957 = vcvt.f32.s32.to.zero.pseudo %v893
      %v958 = vcvt.f32.s32.to.zero.pseudo %v894
      %v959 = vcvt.f32.s32.to.zero.pseudo %v895
      %v960 = vcvt.f32.s32.to.zero.pseudo %v896
      %v961 = vcvt.f32.s32.to.zero.pseudo %v897
      %v962 = vcvt.f32.s32.to.zero.pseudo %v898
      %v963 = vcvt.f32.s32.to.zero.pseudo %v899
      %v964 = vcvt.f32.s32.to.zero.pseudo %v900
      %v965 = vcvt.f32.s32.to.zero.pseudo %v901
      %v966 = vcvt.f32.s32.to.zero.pseudo %v902
      %v967 = vcvt.f32.s32.to.zero.pseudo %v903
      %v968 = vcvt.f32.s32.to.zero.pseudo %v904
      %v969 = vcvt.f32.s32.to.zero.pseudo %v905
      %v970 = vcvt.f32.s32.to.zero.pseudo %v906
      %v971 = vcvt.f32.s32.to.zero.pseudo %v907
      %v972 = vcvt.f32.s32.to.zero.pseudo %v908
      %v973 = vcvt.f32.s32.to.zero.pseudo %v909
      %v974 = vcvt.f32.s32.to.zero.pseudo %v910
      %v975 = vcvt.f32.s32.to.zero.pseudo %v911
      %v976 = vcvt.f32.s32.to.zero.pseudo %v912
      %v977 = vcvt.f32.s32.to.zero.pseudo %v913
      %v978 = vcvt.f32.s32.to.zero.pseudo %v914
      %v979 = vcvt.f32.s32.to.zero.pseudo %v915
      %v980 = vcvt.f32.s32.to.zero.pseudo %v916
      %v981 = vcvt.f32.s32.to.zero.pseudo %v917
      %v982 = vcvt.f32.s32.to.zero.pseudo %v918
      %v983 = vcvt.f32.s32.to.zero.pseudo %v919
      %v984 = vcvt.f32.s32.to.zero.pseudo %v920
      %v985 = vcvt.f32.s32.to.zero.pseudo %v921
      %v986 = vcvt.f32.s32.to.zero.pseudo %v922
      %v987 = vcvt.f32.s32.to.zero.pseudo %v923
      %v988 = vcvt.f32.s32.to.zero.pseudo %v924
      %v989 = vcvt.f32.s32.to.zero.pseudo %v925
      %v990 = vcvt.f32.s32.to.zero.pseudo %v926
      %v991 = vcvt.f32.s32.to.zero.pseudo %v927
      %v992 = vand.u32 %v800, %v928
      %v993 = vand.u32 %v801, %v929
      %v994 = vand.u32 %v802, %v930
      %v995 = vand.u32 %v803, %v931
      %v996 = vand.u32 %v804, %v932
      %v997 = vand.u32 %v805, %v933
      %v998 = vand.u32 %v806, %v934
      %v999 = vand.u32 %v807, %v935
      %v1000 = vand.u32 %v808, %v936
      %v1001 = vand.u32 %v809, %v937
      %v1002 = vand.u32 %v810, %v938
      %v1003 = vand.u32 %v811, %v939
      %v1004 = vand.u32 %v812, %v940
      %v1005 = vand.u32 %v813, %v941
      %v1006 = vand.u32 %v814, %v942
      %v1007 = vand.u32 %v815, %v943
      %v1008 = vand.u32 %v816, %v944
      %v1009 = vand.u32 %v817, %v945
      %v1010 = vand.u32 %v818, %v946
      %v1011 = vand.u32 %v819, %v947
      %v1012 = vand.u32 %v820, %v948
      %v1013 = vand.u32 %v821, %v949
      %v1014 = vand.u32 %v822, %v950
      %v1015 = vand.u32 %v823, %v951
      %v1016 = vand.u32 %v824, %v952
      %v1017 = vand.u32 %v825, %v953
      %v1018 = vand.u32 %v826, %v954
      %v1019 = vand.u32 %v827, %v955
      %v1020 = vand.u32 %v828, %v956
      %v1021 = vand.u32 %v829, %v957
      %v1022 = vand.u32 %v830, %v958
      %v1023 = vand.u32 %v831, %v959
      %v1024 = vand.u32 %v832, %v960
      %v1025 = vand.u32 %v833, %v961
      %v1026 = vand.u32 %v834, %v962
      %v1027 = vand.u32 %v835, %v963
      %v1028 = vand.u32 %v836, %v964
      %v1029 = vand.u32 %v837, %v965
      %v1030 = vand.u32 %v838, %v966
      %v1031 = vand.u32 %v839, %v967
      %v1032 = vand.u32 %v840, %v968
      %v1033 = vand.u32 %v841, %v969
      %v1034 = vand.u32 %v842, %v970
      %v1035 = vand.u32 %v843, %v971
      %v1036 = vand.u32 %v844, %v972
      %v1037 = vand.u32 %v845, %v973
      %v1038 = vand.u32 %v846, %v974
      %v1039 = vand.u32 %v847, %v975
      %v1040 = vand.u32 %v848, %v976
      %v1041 = vand.u32 %v849, %v977
      %v1042 = vand.u32 %v850, %v978
      %v1043 = vand.u32 %v851, %v979
      %v1044 = vand.u32 %v852, %v980
      %v1045 = vand.u32 %v853, %v981
      %v1046 = vand.u32 %v854, %v982
      %v1047 = vand.u32 %v855, %v983
      %v1048 = vand.u32 %v856, %v984
      %v1049 = vand.u32 %v857, %v985
      %v1050 = vand.u32 %v858, %v986
      %v1051 = vand.u32 %v859, %v987
      %v1052 = vand.u32 %v860, %v988
      %v1053 = vand.u32 %v861, %v989
      %v1054 = vand.u32 %v862, %v990
      %v1055 = vand.u32 %v863, %v991
      %v1056 = vor.u32 %v800, %v928
      %v1057 = vor.u32 %v801, %v929
      %v1058 = vor.u32 %v802, %v930
      %v1059 = vor.u32 %v803, %v931
      %v1060 = vor.u32 %v804, %v932
      %v1061 = vor.u32 %v805, %v933
      %v1062 = vor.u32 %v806, %v934
      %v1063 = vor.u32 %v807, %v935
      %v1064 = vor.u32 %v808, %v936
      %v1065 = vor.u32 %v809, %v937
      %v1066 = vor.u32 %v810, %v938
      %v1067 = vor.u32 %v811, %v939
      %v1068 = vor.u32 %v812, %v940
      %v1069 = vor.u32 %v813, %v941
      %v1070 = vor.u32 %v814, %v942
      %v1071 = vor.u32 %v815, %v943
      %v1072 = vor.u32 %v816, %v944
      %v1073 = vor.u32 %v817, %v945
      %v1074 = vor.u32 %v818, %v946
      %v1075 = vor.u32 %v819, %v947
      %v1076 = vor.u32 %v820, %v948
      %v1077 = vor.u32 %v821, %v949
      %v1078 = vor.u32 %v822, %v950
      %v1079 = vor.u32 %v823, %v951
      %v1080 = vor.u32 %v824, %v952
      %v1081 = vor.u32 %v825, %v953
      %v1082 = vor.u32 %v826, %v954
      %v1083 = vor.u32 %v827, %v955
      %v1084 = vor.u32 %v828, %v956
      %v1085 = vor.u32 %v829, %v957
      %v1086 = vor.u32 %v830, %v958
      %v1087 = vor.u32 %v831, %v959
      %v1088 = vor.u32 %v832, %v960
      %v1089 = vor.u32 %v833, %v961
      %v1090 = vor.u32 %v834, %v962
      %v1091 = vor.u32 %v835, %v963
      %v1092 = vor.u32 %v836, %v964
      %v1093 = vor.u32 %v837, %v965
      %v1094 = vor.u32 %v838, %v966
      %v1095 = vor.u32 %v839, %v967
      %v1096 = vor.u32 %v840, %v968
      %v1097 = vor.u32 %v841, %v969
      %v1098 = vor.u32 %v842, %v970
      %v1099 = vor.u32 %v843, %v971
      %v1100 = vor.u32 %v844, %v972
      %v1101 = vor.u32 %v845, %v973
      %v1102 = vor.u32 %v846, %v974
      %v1103 = vor.u32 %v847, %v975
      %v1104 = vor.u32 %v848, %v976
      %v1105 = vor.u32 %v849, %v977
      %v1106 = vor.u32 %v850, %v978
      %v1107 = vor.u32 %v851, %v979
      %v1108 = vor.u32 %v852, %v980
      %v1109 = vor.u32 %v853, %v981
      %v1110 = vor.u32 %v854, %v982
      %v1111 = vor.u32 %v855, %v983
      %v1112 = vor.u32 %v856, %v984
      %v1113 = vor.u32 %v857, %v985
      %v1114 = vor.u32 %v858, %v986
      %v1115 = vor.u32 %v859, %v987
      %v1116 = vor.u32 %v860, %v988
      %v1117 = vor.u32 %v861, %v989
      %v1118 = vor.u32 %v862, %v990
      %v1119 = vor.u32 %v863, %v991
      %v1120 = vlaneseq
      %v1121 = vshrl.u32 %v1120, 7
      %v1122 = vadd.s32 %v1121, 8
      %v1123 = vadd.s32 %v1121, 16
      %v1124 = vadd.s32 %v1121, 24
      %v1125 = vadd.s32 %v1121, 32
      %v1126 = vadd.s32 %v1121, 40
      %v1127 = vadd.s32 %v1121, 48
      %v1128 = vadd.s32 %v1121, 56
      %v1129 = vadd.s32 %v1121, 64
      %v1130 = vadd.s32 %v1121, 72
      %v1131 = vadd.s32 %v1121, 80
      %v1132 = vadd.s32 %v1121, 88
      %v1133 = vadd.s32 %v1121, 96
      %v1134 = vadd.s32 %v1121, 104
      %v1135 = vadd.s32 %v1121, 112
      %v1136 = vadd.s32 %v1121, 120
      %v1137 = vadd.s32 %v1121, 128
      %v1138 = vadd.s32 %v1121, 136
      %v1139 = vadd.s32 %v1121, 144
      %v1140 = vadd.s32 %v1121, 152
      %v1141 = vadd.s32 %v1121, 160
      %v1142 = vadd.s32 %v1121, 168
      %v1143 = vadd.s32 %v1121, 176
      %v1144 = vadd.s32 %v1121, 184
      %v1145 = vadd.s32 %v1121, 192
      %v1146 = vadd.s32 %v1121, 200
      %v1147 = vadd.s32 %v1121, 208
      %v1148 = vadd.s32 %v1121, 216
      %v1149 = vadd.s32 %v1121, 224
      %v1150 = vadd.s32 %v1121, 232
      %v1151 = vadd.s32 %v1121, 240
      %v1152 = vadd.s32 %v1121, 248
      %v1153 = vadd.s32 %v1121, 256
      %v1154 = vadd.s32 %v1121, 264
      %v1155 = vadd.s32 %v1121, 272
      %v1156 = vadd.s32 %v1121, 280
      %v1157 = vadd.s32 %v1121, 288
      %v1158 = vadd.s32 %v1121, 296
      %v1159 = vadd.s32 %v1121, 304
      %v1160 = vadd.s32 %v1121, 312
      %v1161 = vadd.s32 %v1121, 320
      %v1162 = vadd.s32 %v1121, 328
      %v1163 = vadd.s32 %v1121, 336
      %v1164 = vadd.s32 %v1121, 344
      %v1165 = vadd.s32 %v1121, 352
      %v1166 = vadd.s32 %v1121, 360
      %v1167 = vadd.s32 %v1121, 368
      %v1168 = vadd.s32 %v1121, 376
      %v1169 = vadd.s32 %v1121, 384
      %v1170 = vadd.s32 %v1121, 392
      %v1171 = vadd.s32 %v1121, 400
      %v1172 = vadd.s32 %v1121, 408
      %v1173 = vadd.s32 %v1121, 416
      %v1174 = vadd.s32 %v1121, 424
      %v1175 = vadd.s32 %v1121, 432
      %v1176 = vadd.s32 %v1121, 440
      %v1177 = vadd.s32 %v1121, 448
      %v1178 = vadd.s32 %v1121, 456
      %v1179 = vadd.s32 %v1121, 464
      %v1180 = vadd.s32 %v1121, 472
      %v1181 = vadd.s32 %v1121, 480
      %v1182 = vadd.s32 %v1121, 488
      %v1183 = vadd.s32 %v1121, 496
      %v1184 = vadd.s32 %v1121, 504
      %v1185 = vstv 0
      %v1186 = vadd.s32 %v1185, %v1121
      %v1187 = vadd.s32 %v1185, %v1122
      %v1188 = vadd.s32 %v1185, %v1123
      %v1189 = vadd.s32 %v1185, %v1124
      %v1190 = vadd.s32 %v1185, %v1125
      %v1191 = vadd.s32 %v1185, %v1126
      %v1192 = vadd.s32 %v1185, %v1127
      %v1193 = vadd.s32 %v1185, %v1128
      %v1194 = vadd.s32 %v1185, %v1129
      %v1195 = vadd.s32 %v1185, %v1130
      %v1196 = vadd.s32 %v1185, %v1131
      %v1197 = vadd.s32 %v1185, %v1132
      %v1198 = vadd.s32 %v1185, %v1133
      %v1199 = vadd.s32 %v1185, %v1134
      %v1200 = vadd.s32 %v1185, %v1135
      %v1201 = vadd.s32 %v1185, %v1136
      %v1202 = vadd.s32 %v1185, %v1137
      %v1203 = vadd.s32 %v1185, %v1138
      %v1204 = vadd.s32 %v1185, %v1139
      %v1205 = vadd.s32 %v1185, %v1140
      %v1206 = vadd.s32 %v1185, %v1141
      %v1207 = vadd.s32 %v1185, %v1142
      %v1208 = vadd.s32 %v1185, %v1143
      %v1209 = vadd.s32 %v1185, %v1144
      %v1210 = vadd.s32 %v1185, %v1145
      %v1211 = vadd.s32 %v1185, %v1146
      %v1212 = vadd.s32 %v1185, %v1147
      %v1213 = vadd.s32 %v1185, %v1148
      %v1214 = vadd.s32 %v1185, %v1149
      %v1215 = vadd.s32 %v1185, %v1150
      %v1216 = vadd.s32 %v1185, %v1151
      %v1217 = vadd.s32 %v1185, %v1152
      %v1218 = vadd.s32 %v1185, %v1153
      %v1219 = vadd.s32 %v1185, %v1154
      %v1220 = vadd.s32 %v1185, %v1155
      %v1221 = vadd.s32 %v1185, %v1156
      %v1222 = vadd.s32 %v1185, %v1157
      %v1223 = vadd.s32 %v1185, %v1158
      %v1224 = vadd.s32 %v1185, %v1159
      %v1225 = vadd.s32 %v1185, %v1160
      %v1226 = vadd.s32 %v1185, %v1161
      %v1227 = vadd.s32 %v1185, %v1162
      %v1228 = vadd.s32 %v1185, %v1163
      %v1229 = vadd.s32 %v1185, %v1164
      %v1230 = vadd.s32 %v1185, %v1165
      %v1231 = vadd.s32 %v1185, %v1166
      %v1232 = vadd.s32 %v1185, %v1167
      %v1233 = vadd.s32 %v1185, %v1168
      %v1234 = vadd.s32 %v1185, %v1169
      %v1235 = vadd.s32 %v1185, %v1170
      %v1236 = vadd.s32 %v1185, %v1171
      %v1237 = vadd.s32 %v1185, %v1172
      %v1238 = vadd.s32 %v1185, %v1173
      %v1239 = vadd.s32 %v1185, %v1174
      %v1240 = vadd.s32 %v1185, %v1175
      %v1241 = vadd.s32 %v1185, %v1176
      %v1242 = vadd.s32 %v1185, %v1177
      %v1243 = vadd.s32 %v1185, %v1178
      %v1244 = vadd.s32 %v1185, %v1179
      %v1245 = vadd.s32 %v1185, %v1180
      %v1246 = vadd.s32 %v1185, %v1181
      %v1247 = vadd.s32 %v1185, %v1182
      %v1248 = vadd.s32 %v1185, %v1183
      %v1249 = vadd.s32 %v1185, %v1184
      %vm1250 = vcmp.lt.s32.totalorder %v1186, 16
      %vm1251 = vcmp.lt.s32.totalorder %v1187, 16
      %vm1252 = vcmp.lt.s32.totalorder %v1188, 16
      %vm1253 = vcmp.lt.s32.totalorder %v1189, 16
      %vm1254 = vcmp.lt.s32.totalorder %v1190, 16
      %vm1255 = vcmp.lt.s32.totalorder %v1191, 16
      %vm1256 = vcmp.lt.s32.totalorder %v1192, 16
      %vm1257 = vcmp.lt.s32.totalorder %v1193, 16
      %vm1258 = vcmp.lt.s32.totalorder %v1194, 16
      %vm1259 = vcmp.lt.s32.totalorder %v1195, 16
      %vm1260 = vcmp.lt.s32.totalorder %v1196, 16
      %vm1261 = vcmp.lt.s32.totalorder %v1197, 16
      %vm1262 = vcmp.lt.s32.totalorder %v1198, 16
      %vm1263 = vcmp.lt.s32.totalorder %v1199, 16
      %vm1264 = vcmp.lt.s32.totalorder %v1200, 16
      %vm1265 = vcmp.lt.s32.totalorder %v1201, 16
      %vm1266 = vcmp.lt.s32.totalorder %v1202, 16
      %vm1267 = vcmp.lt.s32.totalorder %v1203, 16
      %vm1268 = vcmp.lt.s32.totalorder %v1204, 16
      %vm1269 = vcmp.lt.s32.totalorder %v1205, 16
      %vm1270 = vcmp.lt.s32.totalorder %v1206, 16
      %vm1271 = vcmp.lt.s32.totalorder %v1207, 16
      %vm1272 = vcmp.lt.s32.totalorder %v1208, 16
      %vm1273 = vcmp.lt.s32.totalorder %v1209, 16
      %vm1274 = vcmp.lt.s32.totalorder %v1210, 16
      %vm1275 = vcmp.lt.s32.totalorder %v1211, 16
      %vm1276 = vcmp.lt.s32.totalorder %v1212, 16
      %vm1277 = vcmp.lt.s32.totalorder %v1213, 16
      %vm1278 = vcmp.lt.s32.totalorder %v1214, 16
      %vm1279 = vcmp.lt.s32.totalorder %v1215, 16
      %vm1280 = vcmp.lt.s32.totalorder %v1216, 16
      %vm1281 = vcmp.lt.s32.totalorder %v1217, 16
      %vm1282 = vcmp.lt.s32.totalorder %v1218, 16
      %vm1283 = vcmp.lt.s32.totalorder %v1219, 16
      %vm1284 = vcmp.lt.s32.totalorder %v1220, 16
      %vm1285 = vcmp.lt.s32.totalorder %v1221, 16
      %vm1286 = vcmp.lt.s32.totalorder %v1222, 16
      %vm1287 = vcmp.lt.s32.totalorder %v1223, 16
      %vm1288 = vcmp.lt.s32.totalorder %v1224, 16
      %vm1289 = vcmp.lt.s32.totalorder %v1225, 16
      %vm1290 = vcmp.lt.s32.totalorder %v1226, 16
      %vm1291 = vcmp.lt.s32.totalorder %v1227, 16
      %vm1292 = vcmp.lt.s32.totalorder %v1228, 16
      %vm1293 = vcmp.lt.s32.totalorder %v1229, 16
      %vm1294 = vcmp.lt.s32.totalorder %v1230, 16
      %vm1295 = vcmp.lt.s32.totalorder %v1231, 16
      %vm1296 = vcmp.lt.s32.totalorder %v1232, 16
      %vm1297 = vcmp.lt.s32.totalorder %v1233, 16
      %vm1298 = vcmp.lt.s32.totalorder %v1234, 16
      %vm1299 = vcmp.lt.s32.totalorder %v1235, 16
      %vm1300 = vcmp.lt.s32.totalorder %v1236, 16
      %vm1301 = vcmp.lt.s32.totalorder %v1237, 16
      %vm1302 = vcmp.lt.s32.totalorder %v1238, 16
      %vm1303 = vcmp.lt.s32.totalorder %v1239, 16
      %vm1304 = vcmp.lt.s32.totalorder %v1240, 16
      %vm1305 = vcmp.lt.s32.totalorder %v1241, 16
      %vm1306 = vcmp.lt.s32.totalorder %v1242, 16
      %vm1307 = vcmp.lt.s32.totalorder %v1243, 16
      %vm1308 = vcmp.lt.s32.totalorder %v1244, 16
      %vm1309 = vcmp.lt.s32.totalorder %v1245, 16
      %vm1310 = vcmp.lt.s32.totalorder %v1246, 16
      %vm1311 = vcmp.lt.s32.totalorder %v1247, 16
      %vm1312 = vcmp.lt.s32.totalorder %v1248, 16
      %vm1313 = vcmp.lt.s32.totalorder %v1249, 16
      %v1314 = vsel %vm1250, %v992, 0
      %v1315 = vsel %vm1251, %v993, 0
      %v1316 = vsel %vm1252, %v994, 0
      %v1317 = vsel %vm1253, %v995, 0
      %v1318 = vsel %vm1254, %v996, 0
      %v1319 = vsel %vm1255, %v997, 0
      %v1320 = vsel %vm1256, %v998, 0
      %v1321 = vsel %vm1257, %v999, 0
      %v1322 = vsel %vm1258, %v1000, 0
      %v1323 = vsel %vm1259, %v1001, 0
      %v1324 = vsel %vm1260, %v1002, 0
      %v1325 = vsel %vm1261, %v1003, 0
      %v1326 = vsel %vm1262, %v1004, 0
      %v1327 = vsel %vm1263, %v1005, 0
      %v1328 = vsel %vm1264, %v1006, 0
      %v1329 = vsel %vm1265, %v1007, 0
      %v1330 = vsel %vm1266, %v1008, 0
      %v1331 = vsel %vm1267, %v1009, 0
      %v1332 = vsel %vm1268, %v1010, 0
      %v1333 = vsel %vm1269, %v1011, 0
      %v1334 = vsel %vm1270, %v1012, 0
      %v1335 = vsel %vm1271, %v1013, 0
      %v1336 = vsel %vm1272, %v1014, 0
      %v1337 = vsel %vm1273, %v1015, 0
      %v1338 = vsel %vm1274, %v1016, 0
      %v1339 = vsel %vm1275, %v1017, 0
      %v1340 = vsel %vm1276, %v1018, 0
      %v1341 = vsel %vm1277, %v1019, 0
      %v1342 = vsel %vm1278, %v1020, 0
      %v1343 = vsel %vm1279, %v1021, 0
      %v1344 = vsel %vm1280, %v1022, 0
      %v1345 = vsel %vm1281, %v1023, 0
      %v1346 = vsel %vm1282, %v1024, 0
      %v1347 = vsel %vm1283, %v1025, 0
      %v1348 = vsel %vm1284, %v1026, 0
      %v1349 = vsel %vm1285, %v1027, 0
      %v1350 = vsel %vm1286, %v1028, 0
      %v1351 = vsel %vm1287, %v1029, 0
      %v1352 = vsel %vm1288, %v1030, 0
      %v1353 = vsel %vm1289, %v1031, 0
      %v1354 = vsel %vm1290, %v1032, 0
      %v1355 = vsel %vm1291, %v1033, 0
      %v1356 = vsel %vm1292, %v1034, 0
      %v1357 = vsel %vm1293, %v1035, 0
      %v1358 = vsel %vm1294, %v1036, 0
      %v1359 = vsel %vm1295, %v1037, 0
      %v1360 = vsel %vm1296, %v1038, 0
      %v1361 = vsel %vm1297, %v1039, 0
      %v1362 = vsel %vm1298, %v1040, 0
      %v1363 = vsel %vm1299, %v1041, 0
      %v1364 = vsel %vm1300, %v1042, 0
      %v1365 = vsel %vm1301, %v1043, 0
      %v1366 = vsel %vm1302, %v1044, 0
      %v1367 = vsel %vm1303, %v1045, 0
      %v1368 = vsel %vm1304, %v1046, 0
      %v1369 = vsel %vm1305, %v1047, 0
      %v1370 = vsel %vm1306, %v1048, 0
      %v1371 = vsel %vm1307, %v1049, 0
      %v1372 = vsel %vm1308, %v1050, 0
      %v1373 = vsel %vm1309, %v1051, 0
      %v1374 = vsel %vm1310, %v1052, 0
      %v1375 = vsel %vm1311, %v1053, 0
      %v1376 = vsel %vm1312, %v1054, 0
      %v1377 = vsel %vm1313, %v1055, 0
      %v1378 = vsel %vm1250, %v1056, 0
      %v1379 = vsel %vm1251, %v1057, 0
      %v1380 = vsel %vm1252, %v1058, 0
      %v1381 = vsel %vm1253, %v1059, 0
      %v1382 = vsel %vm1254, %v1060, 0
      %v1383 = vsel %vm1255, %v1061, 0
      %v1384 = vsel %vm1256, %v1062, 0
      %v1385 = vsel %vm1257, %v1063, 0
      %v1386 = vsel %vm1258, %v1064, 0
      %v1387 = vsel %vm1259, %v1065, 0
      %v1388 = vsel %vm1260, %v1066, 0
      %v1389 = vsel %vm1261, %v1067, 0
      %v1390 = vsel %vm1262, %v1068, 0
      %v1391 = vsel %vm1263, %v1069, 0
      %v1392 = vsel %vm1264, %v1070, 0
      %v1393 = vsel %vm1265, %v1071, 0
      %v1394 = vsel %vm1266, %v1072, 0
      %v1395 = vsel %vm1267, %v1073, 0
      %v1396 = vsel %vm1268, %v1074, 0
      %v1397 = vsel %vm1269, %v1075, 0
      %v1398 = vsel %vm1270, %v1076, 0
      %v1399 = vsel %vm1271, %v1077, 0
      %v1400 = vsel %vm1272, %v1078, 0
      %v1401 = vsel %vm1273, %v1079, 0
      %v1402 = vsel %vm1274, %v1080, 0
      %v1403 = vsel %vm1275, %v1081, 0
      %v1404 = vsel %vm1276, %v1082, 0
      %v1405 = vsel %vm1277, %v1083, 0
      %v1406 = vsel %vm1278, %v1084, 0
      %v1407 = vsel %vm1279, %v1085, 0
      %v1408 = vsel %vm1280, %v1086, 0
      %v1409 = vsel %vm1281, %v1087, 0
      %v1410 = vsel %vm1282, %v1088, 0
      %v1411 = vsel %vm1283, %v1089, 0
      %v1412 = vsel %vm1284, %v1090, 0
      %v1413 = vsel %vm1285, %v1091, 0
      %v1414 = vsel %vm1286, %v1092, 0
      %v1415 = vsel %vm1287, %v1093, 0
      %v1416 = vsel %vm1288, %v1094, 0
      %v1417 = vsel %vm1289, %v1095, 0
      %v1418 = vsel %vm1290, %v1096, 0
      %v1419 = vsel %vm1291, %v1097, 0
      %v1420 = vsel %vm1292, %v1098, 0
      %v1421 = vsel %vm1293, %v1099, 0
      %v1422 = vsel %vm1294, %v1100, 0
      %v1423 = vsel %vm1295, %v1101, 0
      %v1424 = vsel %vm1296, %v1102, 0
      %v1425 = vsel %vm1297, %v1103, 0
      %v1426 = vsel %vm1298, %v1104, 0
      %v1427 = vsel %vm1299, %v1105, 0
      %v1428 = vsel %vm1300, %v1106, 0
      %v1429 = vsel %vm1301, %v1107, 0
      %v1430 = vsel %vm1302, %v1108, 0
      %v1431 = vsel %vm1303, %v1109, 0
      %v1432 = vsel %vm1304, %v1110, 0
      %v1433 = vsel %vm1305, %v1111, 0
      %v1434 = vsel %vm1306, %v1112, 0
      %v1435 = vsel %vm1307, %v1113, 0
      %v1436 = vsel %vm1308, %v1114, 0
      %v1437 = vsel %vm1309, %v1115, 0
      %v1438 = vsel %vm1310, %v1116, 0
      %v1439 = vsel %vm1311, %v1117, 0
      %v1440 = vsel %vm1312, %v1118, 0
      %v1441 = vsel %vm1313, %v1119, 0
      %v1442 = vld [vmem:[#allocation2] sm:$0xff]
      %v1443 = vadd.s32 %v1314, %v1318
      %v1444 = vadd.s32 %v1315, %v1319
      %v1445 = vadd.s32 %v1316, %v1320
      %v1446 = vadd.s32 %v1317, %v1321
      %v1447 = vadd.s32 %v1443, %v1322
      %v1448 = vadd.s32 %v1444, %v1323
      %v1449 = vadd.s32 %v1445, %v1324
      %v1450 = vadd.s32 %v1446, %v1325
      %v1451 = vadd.s32 %v1447, %v1326
      %v1452 = vadd.s32 %v1448, %v1327
      %v1453 = vadd.s32 %v1449, %v1328
      %v1454 = vadd.s32 %v1450, %v1329
      %v1455 = vadd.s32 %v1451, %v1330
      %v1456 = vadd.s32 %v1452, %v1331
      %v1457 = vadd.s32 %v1453, %v1332
      %v1458 = vadd.s32 %v1454, %v1333
      %v1459 = vadd.s32 %v1455, %v1334
      %v1460 = vadd.s32 %v1456, %v1335
      %v1461 = vadd.s32 %v1457, %v1336
      %v1462 = vadd.s32 %v1458, %v1337
      %v1463 = vadd.s32 %v1459, %v1338
      %v1464 = vadd.s32 %v1460, %v1339
      %v1465 = vadd.s32 %v1461, %v1340
      %v1466 = vadd.s32 %v1462, %v1341
      %v1467 = vadd.s32 %v1463, %v1342
      %v1468 = vadd.s32 %v1464, %v1343
      %v1469 = vadd.s32 %v1465, %v1344
      %v1470 = vadd.s32 %v1466, %v1345
      %v1471 = vadd.s32 %v1467, %v1346
      %v1472 = vadd.s32 %v1468, %v1347
      %v1473 = vadd.s32 %v1469, %v1348
      %v1474 = vadd.s32 %v1470, %v1349
      %v1475 = vadd.s32 %v1471, %v1350
      %v1476 = vadd.s32 %v1472, %v1351
      %v1477 = vadd.s32 %v1473, %v1352
      %v1478 = vadd.s32 %v1474, %v1353
      %v1479 = vadd.s32 %v1475, %v1354
      %v1480 = vadd.s32 %v1476, %v1355
      %v1481 = vadd.s32 %v1477, %v1356
      %v1482 = vadd.s32 %v1478, %v1357
      %v1483 = vadd.s32 %v1479, %v1358
      %v1484 = vadd.s32 %v1480, %v1359
      %v1485 = vadd.s32 %v1481, %v1360
      %v1486 = vadd.s32 %v1482, %v1361
      %v1487 = vadd.s32 %v1483, %v1362
      %v1488 = vadd.s32 %v1484, %v1363
      %v1489 = vadd.s32 %v1485, %v1364
      %v1490 = vadd.s32 %v1486, %v1365
      %v1491 = vadd.s32 %v1487, %v1366
      %v1492 = vadd.s32 %v1488, %v1367
      %v1493 = vadd.s32 %v1489, %v1368
      %v1494 = vadd.s32 %v1490, %v1369
      %v1495 = vadd.s32 %v1491, %v1370
      %v1496 = vadd.s32 %v1492, %v1371
      %v1497 = vadd.s32 %v1493, %v1372
      %v1498 = vadd.s32 %v1494, %v1373
      %v1499 = vadd.s32 %v1495, %v1374
      %v1500 = vadd.s32 %v1496, %v1375
      %v1501 = vadd.s32 %v1497, %v1376
      %v1502 = vadd.s32 %v1498, %v1377
      %v1503 = vadd.s32 %v1499, %v1500
      %v1504 = vadd.s32 %v1501, %v1502
      %v1505 = vadd.s32 %v1503, %v1504
      %v1506 = vadd.s32 %v1442, %v1505
      %1507 = vst [vmem:[#allocation2] sm:$0xff] %v1506
      %s1508 = scalar_lea.vmem [#allocation2], 8
      %v1509 = vld [vmem:[%s1508] sm:$0xff]
      %v1510 = vadd.s32 %v1378, %v1382
      %v1511 = vadd.s32 %v1379, %v1383
      %v1512 = vadd.s32 %v1380, %v1384
      %v1513 = vadd.s32 %v1381, %v1385
      %v1514 = vadd.s32 %v1510, %v1386
      %v1515 = vadd.s32 %v1511, %v1387
      %v1516 = vadd.s32 %v1512, %v1388
      %v1517 = vadd.s32 %v1513, %v1389
      %v1518 = vadd.s32 %v1514, %v1390
      %v1519 = vadd.s32 %v1515, %v1391
      %v1520 = vadd.s32 %v1516, %v1392
      %v1521 = vadd.s32 %v1517, %v1393
      %v1522 = vadd.s32 %v1518, %v1394
      %v1523 = vadd.s32 %v1519, %v1395
      %v1524 = vadd.s32 %v1520, %v1396
      %v1525 = vadd.s32 %v1521, %v1397
      %v1526 = vadd.s32 %v1522, %v1398
      %v1527 = vadd.s32 %v1523, %v1399
      %v1528 = vadd.s32 %v1524, %v1400
      %v1529 = vadd.s32 %v1525, %v1401
      %v1530 = vadd.s32 %v1526, %v1402
      %v1531 = vadd.s32 %v1527, %v1403
      %v1532 = vadd.s32 %v1528, %v1404
      %v1533 = vadd.s32 %v1529, %v1405
      %v1534 = vadd.s32 %v1530, %v1406
      %v1535 = vadd.s32 %v1531, %v1407
      %v1536 = vadd.s32 %v1532, %v1408
      %v1537 = vadd.s32 %v1533, %v1409
      %v1538 = vadd.s32 %v1534, %v1410
      %v1539 = vadd.s32 %v1535, %v1411
      %v1540 = vadd.s32 %v1536, %v1412
      %v1541 = vadd.s32 %v1537, %v1413
      %v1542 = vadd.s32 %v1538, %v1414
      %v1543 = vadd.s32 %v1539, %v1415
      %v1544 = vadd.s32 %v1540, %v1416
      %v1545 = vadd.s32 %v1541, %v1417
      %v1546 = vadd.s32 %v1542, %v1418
      %v1547 = vadd.s32 %v1543, %v1419
      %v1548 = vadd.s32 %v1544, %v1420
      %v1549 = vadd.s32 %v1545, %v1421
      %v1550 = vadd.s32 %v1546, %v1422
      %v1551 = vadd.s32 %v1547, %v1423
      %v1552 = vadd.s32 %v1548, %v1424
      %v1553 = vadd.s32 %v1549, %v1425
      %v1554 = vadd.s32 %v1550, %v1426
      %v1555 = vadd.s32 %v1551, %v1427
      %v1556 = vadd.s32 %v1552, %v1428
      %v1557 = vadd.s32 %v1553, %v1429
      %v1558 = vadd.s32 %v1554, %v1430
      %v1559 = vadd.s32 %v1555, %v1431
      %v1560 = vadd.s32 %v1556, %v1432
      %v1561 = vadd.s32 %v1557, %v1433
      %v1562 = vadd.s32 %v1558, %v1434
      %v1563 = vadd.s32 %v1559, %v1435
      %v1564 = vadd.s32 %v1560, %v1436
      %v1565 = vadd.s32 %v1561, %v1437
      %v1566 = vadd.s32 %v1562, %v1438
      %v1567 = vadd.s32 %v1563, %v1439
      %v1568 = vadd.s32 %v1564, %v1440
      %v1569 = vadd.s32 %v1565, %v1441
      %v1570 = vadd.s32 %v1566, %v1567
      %v1571 = vadd.s32 %v1568, %v1569
      %v1572 = vadd.s32 %v1570, %v1571
      %v1573 = vadd.s32 %v1509, %v1572
      %1574 = vst [vmem:[%s1508] sm:$0xff] %v1573
    $region21: #{loss_iou.1} parent=1 // pred_fallthru
      _
    // Predicated region
    $region22: #{loss_iou.1} parent=1 // pred_check
      %p1575 = pneg %p77
    $region23: #{loss_iou.1} parent=1 // pred_check_branch
      %1577 = sbr.rel (%p1575) target = $region25
    $region24: #{loss_iou.1} parent=1 // pred_region
      %v1578 = vld [vmem:[#allocation2] sm:$0xff]
      %v1579 = vand.u32 %v1578, 65535
      %v1580 = vshrl.u32 %v1578, 16
      %v1581 = vcvt.s32.f32 %v1579
      %v1582 = vcvt.s32.f32 %v1580
      %1583 = vadd.xlane.f32.xlu0 %v1581
      %v1584 = vpop.xlane.xlu0 %1583
      %1585 = vadd.xlane.f32.xlu0 %v1582
      %v1586 = vpop.xlane.xlu0 %1585
      %v1587 = vcvt.f32.s32 %v1584
      %v1588 = vcvt.f32.s32 %v1586
      %v1589 = vshll.u32 %v1588, 16
      %v1590 = vadd.s32 %v1589, %v1587
      %v1591 = vrot.slane %v1590, 4
      %v1592 = vadd.s32 %v1590, %v1591
      %v1593 = vrot.slane %v1592, 2
      %v1594 = vadd.s32 %v1592, %v1593
      %v1595 = vrot.slane %v1594, 1
      %v1596 = vadd.s32 %v1594, %v1595
      %s1597 = vtos %v1596
      %s1598 = scalar_lea.smem [#allocation3], 0
      %1599 = sst [smem:[%s1598]] %s1597
      %s1600 = scalar_lea.vmem [#allocation2], 8
      %v1601 = vld [vmem:[%s1600] sm:$0xff]
      %v1602 = vand.u32 %v1601, 65535
      %v1603 = vshrl.u32 %v1601, 16
      %v1604 = vcvt.s32.f32 %v1602
      %v1605 = vcvt.s32.f32 %v1603
      %1606 = vadd.xlane.f32.xlu0 %v1604
      %v1607 = vpop.xlane.xlu0 %1606
      %1608 = vadd.xlane.f32.xlu0 %v1605
      %v1609 = vpop.xlane.xlu0 %1608
      %v1610 = vcvt.f32.s32 %v1607
      %v1611 = vcvt.f32.s32 %v1609
      %v1612 = vshll.u32 %v1611, 16
      %v1613 = vadd.s32 %v1612, %v1610
      %v1614 = vrot.slane %v1613, 4
      %v1615 = vadd.s32 %v1613, %v1614
      %v1616 = vrot.slane %v1615, 2
      %v1617 = vadd.s32 %v1615, %v1616
      %v1618 = vrot.slane %v1617, 1
      %v1619 = vadd.s32 %v1617, %v1618
      %s1620 = vtos %v1619
      %s1621 = scalar_lea.smem [#allocation3], 1
      %1622 = sst [smem:[%s1621]] %s1620
    $region25: #{loss_iou.1} parent=1 // pred_fallthru
      _
    // Predicated region
    $region26: #{loss_iou.1} parent=1 // pred_check
      _
    $region27: #{loss_iou.1} parent=1 // pred_check_branch
      %1624 = sbr.rel (0) target = $region29
    $region28: #{loss_iou.1} parent=1 // pred_region
      %1626 = vsyncadd [#allocation4], 0
      %s1628 = sshll.u32 %s2, 4
      %s1629 = int_to_ptr.vmem [resolvable:$true] %s1628
      %1631 = dma.smem_to_vmem [#allocation3], 16, %s1629, [#allocation4]
    $region29: #{loss_iou.1} parent=1 // pred_fallthru
      _
    // Predicated region
    $region30: #{loss_iou.1} parent=1 // pred_check
      _
    $region31: #{loss_iou.1} parent=1 // pred_check_branch
      %1633 = sbr.rel (0) target = $region33
    $region32: #{loss_iou.1} parent=1 // pred_region
      %1635 = dma.done [#allocation4], 16
    $region33: #{loss_iou.1} parent=1 // pred_fallthru
      _
    %1636 = sfence
    %1637 = vsyncpa [#allocation4], 1

</llo_original>
